<compile_context>
chip_gen: v7x
topology: tpu7x:2x2x1
jax: 0.10.0
libtpu: 0.0.40
codegen_flags: <defaults>
</compile_context>

<pallas_src>
import functools

import jax
import jax.numpy as jnp
from jax.experimental import pallas as pl
from jax.experimental.pallas import tpu as pltpu


def _round_up(x, m):
    return (x + m - 1) // m * m


def _mlp_kernel(x_ref, w1_ref, b1_ref, w2_ref, b2_ref, w3_ref, b3_ref,
                o_ref, acc_ref):
    k = pl.program_id(1)

    @pl.when(k == 0)
    def _init():
        acc_ref[...] = jnp.zeros_like(acc_ref)

    # fc1 partial product for this K tile: bf16 x bf16 on the MXU, f32 accum.
    acc_ref[...] += jnp.dot(x_ref[...], w1_ref[...],
                            preferred_element_type=jnp.float32)

    @pl.when(k == pl.num_programs(1) - 1)
    def _finalize():
        # bias + ReLU in f32, then fc2 / fc3 in bf16 with f32 accumulation.
        h = jnp.maximum(acc_ref[...] + b1_ref[...], 0.0)
        h = jnp.dot(h.astype(jnp.bfloat16), w2_ref[...],
                    preferred_element_type=jnp.float32)
        h = jnp.maximum(h + b2_ref[...], 0.0)
        y = jnp.dot(h.astype(jnp.bfloat16), w3_ref[...],
                    preferred_element_type=jnp.float32)
        y = y + b3_ref[...]
        o_ref[...] = y.astype(o_ref.dtype)


@functools.partial(jax.jit, static_argnames=("tile_m", "tile_k"))
def mlp_forward(x, w1t, b1, w2t, b2, w3t, b3, *, tile_m=256, tile_k=1536):
    """x: (B, N, L, 768) f32. Weights already in kernel layout (see prepare_params).

    Returns (B, N, 768) f32 (output_len == 1, exactly like the PyTorch view).
    """
    B, N, L, E = x.shape
    d_in = L * E
    hidden = w1t.shape[1]          # w1t: (d_in, hidden) bf16
    d_out = w3t.shape[1]           # w3t: (hidden, d_out) bf16
    assert d_out == E, "module's view(B, N, 768) implies output_len == 1"

    M = B * N
    xm = x.reshape(M, d_in).astype(jnp.bfloat16)

    # --- row tile: as large as possible, but keep >=2 grid steps when M allows
    # it so dimension_semantics=("parallel", ...) can shard across 2 TCs (v7x).
    tile_m_eff = min(tile_m, _round_up(M, 8))
    if _round_up(M, tile_m_eff) // tile_m_eff < 2 and M > 16:
        tile_m_eff = _round_up(_round_up(M, 2) // 2, 8)
    M_pad = _round_up(M, tile_m_eff)

    # --- K tile over d_in for fc1 (d_in is always a multiple of 128).
    tile_k_eff = min(tile_k, d_in)
    K_pad = _round_up(d_in, tile_k_eff)

    if M_pad != M or K_pad != d_in:
        xm = jnp.pad(xm, ((0, M_pad - M), (0, K_pad - d_in)))
    if K_pad != d_in:
        w1t = jnp.pad(w1t, ((0, K_pad - d_in), (0, 0)))

    grid = (M_pad // tile_m_eff, K_pad // tile_k_eff)

    # Constant blocks (same tile every grid step): single-buffer them so they
    # don't burn 2x VMEM on double buffering.
    def const(shape):
        return pl.BlockSpec(shape, lambda i, k: (0, 0),
                            pipeline_mode=pl.Buffered(1))

    out = pl.pallas_call(
        _mlp_kernel,
        out_shape=jax.ShapeDtypeStruct((M_pad, d_out), jnp.float32),
        grid_spec=pltpu.PrefetchScalarGridSpec(
            num_scalar_prefetch=0,
            grid=grid,
            in_specs=[
                pl.BlockSpec((tile_m_eff, tile_k_eff), lambda i, k: (i, k)),  # x
                pl.BlockSpec((tile_k_eff, hidden), lambda i, k: (k, 0)),      # W1^T (K-tiled)
                const((1, hidden)),                                           # b1
                const((hidden, hidden)),                                      # W2^T
                const((1, hidden)),                                           # b2
                const((hidden, d_out)),                                       # W3^T
                const((1, d_out)),                                            # b3
            ],
            out_specs=pl.BlockSpec((tile_m_eff, d_out), lambda i, k: (i, 0)),
            scratch_shapes=[pltpu.VMEM((tile_m_eff, hidden), jnp.float32)],
        ),
        compiler_params=pltpu.CompilerParams(
            dimension_semantics=("parallel", "arbitrary"),
            vmem_limit_bytes=48 * 1024 * 1024,   # above 16/32 MiB defaults, safe on v7x
        ),
    )(xm, w1t, b1, w2t, b2, w3t, b3)

    out = out[:M]                  # drop padded rows
    return out.reshape(B, N, E)    # output_len == 1 -> view(B, N, 768)


def init_params(key, input_len, hidden_size, output_len, embed=768):
    """PyTorch-layout f32 params: W (out, in), b (out,), nn.Linear-style init."""
    d_in = input_len * embed
    d_out = output_len * embed
    ks = jax.random.split(key, 6)

    def linear(kw, kb, fan_in, fan_out):
        bound = 1.0 / jnp.sqrt(fan_in)
        w = jax.random.uniform(kw, (fan_out, fan_in), jnp.float32, -bound, bound)
        b = jax.random.uniform(kb, (fan_out,), jnp.float32, -bound, bound)
        return w, b

    w1, b1 = linear(ks[0], ks[1], d_in, hidden_size)
    w2, b2 = linear(ks[2], ks[3], hidden_size, hidden_size)
    w3, b3 = linear(ks[4], ks[5], hidden_size, d_out)
    return w1, b1, w2, b2, w3, b3


def prepare_params(w1, b1, w2, b2, w3, b3):
    """ONE-TIME conversion to kernel layout: (in, out) bf16 weights, (1, out) f32 biases."""
    return (
        jnp.asarray(w1.T, jnp.bfloat16), b1.reshape(1, -1).astype(jnp.float32),
        jnp.asarray(w2.T, jnp.bfloat16), b2.reshape(1, -1).astype(jnp.float32),
        jnp.asarray(w3.T, jnp.bfloat16), b3.reshape(1, -1).astype(jnp.float32),
    )


if __name__ == "__main__":
    # Small shapes consistent with the module: (B, N, input_len, 768).
    B, N, input_len, embed = 2, 4, 2, 768
    hidden_size, output_len = 128, 1

    key = jax.random.PRNGKey(0)
    kx, kp = jax.random.split(key)
    x = jax.random.uniform(kx, (B, N, input_len, embed), jnp.float32)

    torch_params = init_params(kp, input_len, hidden_size, output_len, embed)
    params = prepare_params(*torch_params)   # done once, outside the forward

    out = mlp_forward(x, *params)
    out = jax.block_until_ready(out)
    assert out.shape == (B, N, embed), out.shape

    # Reference 1: identical bf16-weight math in plain JAX (tight tolerance).
    w1t, b1, w2t, b2, w3t, b3 = params
    xm = x.reshape(B * N, input_len * embed).astype(jnp.bfloat16)
    h = jnp.maximum(jnp.dot(xm, w1t, preferred_element_type=jnp.float32) + b1, 0.0)
    h = jnp.maximum(jnp.dot(h.astype(jnp.bfloat16), w2t,
                            preferred_element_type=jnp.float32) + b2, 0.0)
    ref_bf16 = (jnp.dot(h.astype(jnp.bfloat16), w3t,
                        preferred_element_type=jnp.float32) + b3).reshape(B, N, embed)
    assert jnp.allclose(out, ref_bf16, atol=2e-3, rtol=2e-3), \
        float(jnp.max(jnp.abs(out - ref_bf16)))

    # Reference 2: full f32 PyTorch math (loose tolerance due to bf16 weights).
    w1, fb1, w2, fb2, w3, fb3 = torch_params
    xf = x.reshape(B * N, input_len * embed)
    hf = jnp.maximum(xf @ w1.T + fb1, 0.0)
    hf = jnp.maximum(hf @ w2.T + fb2, 0.0)
    ref_f32 = (hf @ w3.T + fb3).reshape(B, N, embed)
    assert jnp.allclose(out, ref_f32, atol=5e-2, rtol=5e-2), \
        float(jnp.max(jnp.abs(out - ref_f32)))

    print("KERNEL_OK")
</pallas_src>

<mosaic_0001>
module attributes {stable_mosaic.version = 11 : i64} {
  func.func @_mlp_kernel(%arg0: i32, %arg1: i32, %arg2: memref<8x1536xbf16, #tpu.memory_space<vmem>>, %arg3: memref<1536x128xbf16, #tpu.memory_space<vmem>>, %arg4: memref<1x128xf32, #tpu.memory_space<vmem>>, %arg5: memref<128x128xbf16, #tpu.memory_space<vmem>>, %arg6: memref<1x128xf32, #tpu.memory_space<vmem>>, %arg7: memref<128x768xbf16, #tpu.memory_space<vmem>>, %arg8: memref<1x768xf32, #tpu.memory_space<vmem>>, %arg9: memref<8x768xf32, #tpu.memory_space<vmem>>, %arg10: memref<8x128xf32, #tpu.memory_space<vmem>>) attributes {dimension_semantics = [#tpu.dimension_semantics<parallel>, #tpu.dimension_semantics<arbitrary>], iteration_bounds = array<i64: 1, 1>, scalar_prefetch = 0 : i64, scratch_operands = 1 : i64, tpu.core_type = #tpu.core_type<tc>, window_params = [{transform_indices = @transform_0, window_bounds = array<i64: 8, 1536>}, {transform_indices = @transform_1, window_bounds = array<i64: 1536, 128>}, {pipeline_mode = #tpu.pipeline_mode<synchronous>, transform_indices = @transform_2, window_bounds = array<i64: 1, 128>}, {pipeline_mode = #tpu.pipeline_mode<synchronous>, transform_indices = @transform_3, window_bounds = array<i64: 128, 128>}, {pipeline_mode = #tpu.pipeline_mode<synchronous>, transform_indices = @transform_4, window_bounds = array<i64: 1, 128>}, {pipeline_mode = #tpu.pipeline_mode<synchronous>, transform_indices = @transform_5, window_bounds = array<i64: 128, 768>}, {pipeline_mode = #tpu.pipeline_mode<synchronous>, transform_indices = @transform_6, window_bounds = array<i64: 1, 768>}, {transform_indices = @transform_7, window_bounds = array<i64: 8, 768>}]} {
    %c0_i32 = arith.constant 0 : i32
    %0 = arith.cmpi eq, %arg1, %c0_i32 : i32
    %1 = arith.extui %0 : i1 to i32
    %c0_i32_0 = arith.constant 0 : i32
    %2 = arith.cmpi ne, %1, %c0_i32_0 : i32
    scf.if %2 {
      %cst_10 = arith.constant 0.000000e+00 : f32
      %12 = vector.broadcast %cst_10 : f32 to vector<8x128xf32>
      %c0_11 = arith.constant 0 : index
      %c0_12 = arith.constant 0 : index
      %13 = vector.load %arg10[%c0_11, %c0_12] : memref<8x128xf32, #tpu.memory_space<vmem>>, vector<8x128xf32>
      tpu.vector_store %arg10[%c0_11, %c0_12], %12 {strides = array<i32>} : memref<8x128xf32, #tpu.memory_space<vmem>>, vector<8x128xf32>,
    } else {
    }
    %c0 = arith.constant 0 : index
    %c0_1 = arith.constant 0 : index
    %3 = vector.load %arg10[%c0, %c0_1] : memref<8x128xf32, #tpu.memory_space<vmem>>, vector<8x128xf32>
    %c0_2 = arith.constant 0 : index
    %c0_3 = arith.constant 0 : index
    %4 = vector.load %arg2[%c0_2, %c0_3] : memref<8x1536xbf16, #tpu.memory_space<vmem>>, vector<8x1536xbf16>
    %c0_4 = arith.constant 0 : index
    %c0_5 = arith.constant 0 : index
    %5 = vector.load %arg3[%c0_4, %c0_5] : memref<1536x128xbf16, #tpu.memory_space<vmem>>, vector<1536x128xbf16>
    %cst = arith.constant dense<0.000000e+00> : vector<8x128xf32>
    %6 = tpu.matmul %4, %5, %cst {dimension_numbers = #tpu.dot_dimension_numbers<[1], [0], [0], [1], [0, 0, 1, 1], [], []>} : vector<8x1536xbf16>, vector<1536x128xbf16>, vector<8x128xf32> -> vector<8x128xf32>
    %7 = arith.addf %3, %6 : vector<8x128xf32>
    %c0_6 = arith.constant 0 : index
    %c0_7 = arith.constant 0 : index
    %8 = vector.load %arg10[%c0_6, %c0_7] : memref<8x128xf32, #tpu.memory_space<vmem>>, vector<8x128xf32>
    tpu.vector_store %arg10[%c0_6, %c0_7], %7 {strides = array<i32>} : memref<8x128xf32, #tpu.memory_space<vmem>>, vector<8x128xf32>,
    %c0_i32_8 = arith.constant 0 : i32
    %9 = arith.cmpi eq, %arg1, %c0_i32_8 : i32
    %10 = arith.extui %9 : i1 to i32
    %c0_i32_9 = arith.constant 0 : i32
    %11 = arith.cmpi ne, %10, %c0_i32_9 : i32
    scf.if %11 {
      %c0_10 = arith.constant 0 : index
      %c0_11 = arith.constant 0 : index
      %12 = vector.load %arg10[%c0_10, %c0_11] : memref<8x128xf32, #tpu.memory_space<vmem>>, vector<8x128xf32>
      %c0_12 = arith.constant 0 : index
      %c0_13 = arith.constant 0 : index
      %13 = vector.load %arg4[%c0_12, %c0_13] : memref<1x128xf32, #tpu.memory_space<vmem>>, vector<1x128xf32>
      %14 = vector.broadcast %13 : vector<1x128xf32> to vector<8x128xf32>
      %15 = arith.addf %12, %14 : vector<8x128xf32>
      %cst_14 = arith.constant 0.000000e+00 : f32
      %16 = vector.broadcast %cst_14 : f32 to vector<8x128xf32>
      %17 = arith.maximumf %15, %16 : vector<8x128xf32>
      %18 = arith.truncf %17 : vector<8x128xf32> to vector<8x128xbf16>
      %c0_15 = arith.constant 0 : index
      %c0_16 = arith.constant 0 : index
      %19 = vector.load %arg5[%c0_15, %c0_16] : memref<128x128xbf16, #tpu.memory_space<vmem>>, vector<128x128xbf16>
      %cst_17 = arith.constant dense<0.000000e+00> : vector<8x128xf32>
      %20 = tpu.matmul %18, %19, %cst_17 {dimension_numbers = #tpu.dot_dimension_numbers<[1], [0], [0], [1], [0, 0, 1, 1], [], []>} : vector<8x128xbf16>, vector<128x128xbf16>, vector<8x128xf32> -> vector<8x128xf32>
      %c0_18 = arith.constant 0 : index
      %c0_19 = arith.constant 0 : index
      %21 = vector.load %arg6[%c0_18, %c0_19] : memref<1x128xf32, #tpu.memory_space<vmem>>, vector<1x128xf32>
      %22 = vector.broadcast %21 : vector<1x128xf32> to vector<8x128xf32>
      %23 = arith.addf %20, %22 : vector<8x128xf32>
      %cst_20 = arith.constant 0.000000e+00 : f32
      %24 = vector.broadcast %cst_20 : f32 to vector<8x128xf32>
      %25 = arith.maximumf %23, %24 : vector<8x128xf32>
      %26 = arith.truncf %25 : vector<8x128xf32> to vector<8x128xbf16>
      %c0_21 = arith.constant 0 : index
      %c0_22 = arith.constant 0 : index
      %27 = vector.load %arg7[%c0_21, %c0_22] : memref<128x768xbf16, #tpu.memory_space<vmem>>, vector<128x768xbf16>
      %cst_23 = arith.constant dense<0.000000e+00> : vector<8x768xf32>
      %28 = tpu.matmul %26, %27, %cst_23 {dimension_numbers = #tpu.dot_dimension_numbers<[1], [0], [0], [1], [0, 0, 1, 1], [], []>} : vector<8x128xbf16>, vector<128x768xbf16>, vector<8x768xf32> -> vector<8x768xf32>
      %c0_24 = arith.constant 0 : index
      %c0_25 = arith.constant 0 : index
      %29 = vector.load %arg8[%c0_24, %c0_25] : memref<1x768xf32, #tpu.memory_space<vmem>>, vector<1x768xf32>
      %30 = vector.broadcast %29 : vector<1x768xf32> to vector<8x768xf32>
      %31 = arith.addf %28, %30 : vector<8x768xf32>
      %c0_26 = arith.constant 0 : index
      %c0_27 = arith.constant 0 : index
      %32 = vector.load %arg9[%c0_26, %c0_27] : memref<8x768xf32, #tpu.memory_space<vmem>>, vector<8x768xf32>
      tpu.vector_store %arg9[%c0_26, %c0_27], %31 {strides = array<i32>} : memref<8x768xf32, #tpu.memory_space<vmem>>, vector<8x768xf32>,
    } else {
    }
    return
  }
  func.func @transform_0(%arg0: i32, %arg1: i32) -> (i32, i32) {
    %c0_i32 = arith.constant 0 : i32
    return %arg0, %arg1 : i32, i32
  }
  func.func @transform_1(%arg0: i32, %arg1: i32) -> (i32, i32) {
    %c0_i32 = arith.constant 0 : i32
    %c0_i32_0 = arith.constant 0 : i32
    return %arg1, %c0_i32 : i32, i32
  }
  func.func @transform_2(%arg0: i32, %arg1: i32) -> (i32, i32) {
    %c0_i32 = arith.constant 0 : i32
    %c0_i32_0 = arith.constant 0 : i32
    %c0_i32_1 = arith.constant 0 : i32
    return %c0_i32, %c0_i32_0 : i32, i32
  }
  func.func @transform_3(%arg0: i32, %arg1: i32) -> (i32, i32) {
    %c0_i32 = arith.constant 0 : i32
    %c0_i32_0 = arith.constant 0 : i32
    %c0_i32_1 = arith.constant 0 : i32
    return %c0_i32, %c0_i32_0 : i32, i32
  }
  func.func @transform_4(%arg0: i32, %arg1: i32) -> (i32, i32) {
    %c0_i32 = arith.constant 0 : i32
    %c0_i32_0 = arith.constant 0 : i32
    %c0_i32_1 = arith.constant 0 : i32
    return %c0_i32, %c0_i32_0 : i32, i32
  }
  func.func @transform_5(%arg0: i32, %arg1: i32) -> (i32, i32) {
    %c0_i32 = arith.constant 0 : i32
    %c0_i32_0 = arith.constant 0 : i32
    %c0_i32_1 = arith.constant 0 : i32
    return %c0_i32, %c0_i32_0 : i32, i32
  }
  func.func @transform_6(%arg0: i32, %arg1: i32) -> (i32, i32) {
    %c0_i32 = arith.constant 0 : i32
    %c0_i32_0 = arith.constant 0 : i32
    %c0_i32_1 = arith.constant 0 : i32
    return %c0_i32, %c0_i32_0 : i32, i32
  }
  func.func @transform_7(%arg0: i32, %arg1: i32) -> (i32, i32) {
    %c0_i32 = arith.constant 0 : i32
    %c0_i32_0 = arith.constant 0 : i32
    return %arg0, %c0_i32 : i32, i32
  }
}

</mosaic_0001>

<llo_original>
// kernel: mlp_forward.1
$region0: #{mlp_forward.1}
  #allocation0 [shape = 'u32[]', space=smem, size = 0x4, offset = 0x4, fixed_abs, tag = 'smem constant byte address 0x4 - core index']
  #allocation1 [shape = 'u32[144,128]{1,0:T(1,128)}', space=vmem, size = 0x12000, scoped, tag = 'internal scratch']
  #allocation2 [shape = 'f32[8,128]{1,0:T(8,128)}', space=vmem, size = 0x1000, scoped, tag = 'scratch operand']
  %s0 = inlined_call_operand.vmem [shape: bf16[8,1536], index: 0, kind: input, shape index: {}]
  %s1 = inlined_call_operand.hbm [shape: bf16[1536,128], index: 1, kind: input, shape index: {}]
  %s2 = inlined_call_operand.vmem [shape: f32[1,128], index: 2, kind: input, shape index: {}]
  %s3 = inlined_call_operand.vmem [shape: bf16[128,128], index: 3, kind: input, shape index: {}]
  %s4 = inlined_call_operand.vmem [shape: f32[1,128], index: 4, kind: input, shape index: {}]
  %s5 = inlined_call_operand.hbm [shape: bf16[128,768], index: 5, kind: input, shape index: {}]
  %s6 = inlined_call_operand.vmem [shape: f32[1,768], index: 6, kind: input, shape index: {}]
  %s7 = inlined_call_operand.vmem [shape: f32[8,768], index: 7, kind: output, shape index: {}]
  %s8 = sld [smem:[#allocation0]]
  $region54: #{mlp_forward.1} parent=0
    _
  %s10 = ssub.s32 1, %s8
  %s11 = scalar_select 0, %s10, %s8
  $region1: #{mlp_forward.1} parent=0
    #allocation3 [shape = 'u8[393216]{0}', space=vmem, size = 0x60000, scoped, tag = 'input window, operand 1, single buffered']
    #allocation4 [shape = 's32[1]{0}', space=sflag, size = 0x4, scoped, tag = 'scoped memory for mlp_forward.1']
    #allocation5 [shape = 'u8[196608]{0}', space=vmem, size = 0x30000, scoped, tag = 'input window, operand 5, single buffered']
    #allocation6 [shape = 's32[1]{0}', space=sflag, size = 0x4, scoped, tag = 'scoped memory for mlp_forward.1']
    %12 = vsyncpa [#allocation4], 0
    %13 = vsyncpa [#allocation6], 0
    // Predicated region
    $region2: #{mlp_forward.1} parent=1 // pred_check
      _
    $region3: #{mlp_forward.1} parent=1 // pred_check_branch
      %15 = sbr.rel (0) target = $region5
    $region4: #{mlp_forward.1} parent=1 // pred_region
      _
    $region5: #{mlp_forward.1} parent=1 // pred_fallthru
      _
    // Predicated region
    $region6: #{mlp_forward.1} parent=1 // pred_check
      _
    $region7: #{mlp_forward.1} parent=1 // pred_check_branch
      %17 = sbr.rel (0) target = $region9
    $region8: #{mlp_forward.1} parent=1 // pred_region
      %s19 = ssub.s32 12288, 12288
      %20 = vsyncadd [#allocation4], %s19
      %s21 = sshll.u32 [#allocation3], 4
      %s22 = int_to_ptr.vmem [resolvable:$true] %s21
      %27 = dma.hbm_to_vmem [thread:$0]  %s1, 12288, %s22, [#allocation4], 64, 64, 4
    $region9: #{mlp_forward.1} parent=1 // pred_fallthru
      _
    // Predicated region
    $region10: #{mlp_forward.1} parent=1 // pred_check
      _
    $region11: #{mlp_forward.1} parent=1 // pred_check_branch
      %29 = sbr.rel (0) target = $region13
    $region12: #{mlp_forward.1} parent=1 // pred_region
      _
    $region13: #{mlp_forward.1} parent=1 // pred_fallthru
      _
    // Predicated region
    $region14: #{mlp_forward.1} parent=1 // pred_check
      _
    $region15: #{mlp_forward.1} parent=1 // pred_check_branch
      %31 = sbr.rel (0) target = $region17
    $region16: #{mlp_forward.1} parent=1 // pred_region
      _
    $region17: #{mlp_forward.1} parent=1 // pred_fallthru
      _
    // Predicated region
    $region18: #{mlp_forward.1} parent=1 // pred_check
      _
    $region19: #{mlp_forward.1} parent=1 // pred_check_branch
      %33 = sbr.rel (0) target = $region21
    $region20: #{mlp_forward.1} parent=1 // pred_region
      _
    $region21: #{mlp_forward.1} parent=1 // pred_fallthru
      _
    // Predicated region
    $region22: #{mlp_forward.1} parent=1 // pred_check
      _
    $region23: #{mlp_forward.1} parent=1 // pred_check_branch
      %35 = sbr.rel (0) target = $region25
    $region24: #{mlp_forward.1} parent=1 // pred_region
      %s37 = ssub.s32 6144, 6144
      %38 = vsyncadd [#allocation6], %s37
      %s39 = sshll.u32 [#allocation5], 4
      %s40 = int_to_ptr.vmem [resolvable:$true] %s39
      %45 = dma.hbm_to_vmem [thread:$0]  %s5, 6144, %s40, [#allocation6], 384, 384, 24
    $region25: #{mlp_forward.1} parent=1 // pred_fallthru
      _
    // Predicated region
    $region26: #{mlp_forward.1} parent=1 // pred_check
      _
    $region27: #{mlp_forward.1} parent=1 // pred_check_branch
      %47 = sbr.rel (0) target = $region29
    $region28: #{mlp_forward.1} parent=1 // pred_region
      _
    $region29: #{mlp_forward.1} parent=1 // pred_fallthru
      _
    // Predicated region
    $region30: #{mlp_forward.1} parent=1 // pred_check
      _
    $region31: #{mlp_forward.1} parent=1 // pred_check_branch
      %49 = sbr.rel (0) target = $region33
    $region32: #{mlp_forward.1} parent=1 // pred_region
      %50 = dma.done [#allocation4], 12288
    $region33: #{mlp_forward.1} parent=1 // pred_fallthru
      _
    // Predicated region
    $region34: #{mlp_forward.1} parent=1 // pred_check
      _
    $region35: #{mlp_forward.1} parent=1 // pred_check_branch
      %52 = sbr.rel (0) target = $region37
    $region36: #{mlp_forward.1} parent=1 // pred_region
      %53 = dma.done [#allocation6], 6144
    $region37: #{mlp_forward.1} parent=1 // pred_fallthru
      _
    %p55 = scmp.eq.s32.totalorder 0, 0
    // Predicated region
    $region38: #{mlp_forward.1} parent=1 // pred_check
      %p56 = pneg %p55
    $region39: #{mlp_forward.1} parent=1 // pred_check_branch
      %58 = sbr.rel (%p56) target = $region41
    $region40: #{mlp_forward.1} parent=1 // pred_region
      %59 = vst [vmem:[#allocation2] sm:$0xff] 0.0
    $region41: #{mlp_forward.1} parent=1 // pred_fallthru
      _
    %v60 = vld [vmem:[#allocation2] sm:$0xff]
    %v61 = vld [vmem:[%s0] sm:$0xff]
    %v62 = vld [vmem:[%s0 + $0x8] sm:$0xff]
    %v63 = vld [vmem:[%s0 + $0x10] sm:$0xff]
    %v64 = vld [vmem:[%s0 + $0x18] sm:$0xff]
    %v65 = vld [vmem:[%s0 + $0x20] sm:$0xff]
    %v66 = vld [vmem:[%s0 + $0x28] sm:$0xff]
    %v67 = vld [vmem:[#allocation3] sm:$0xf]
    %v68 = vld [vmem:[#allocation3 + $0x4] sm:$0xf]
    %v69 = vld [vmem:[#allocation3 + $0x8] sm:$0xf]
    %v70 = vld [vmem:[#allocation3 + $0xc] sm:$0xf]
    %v71 = vld [vmem:[#allocation3 + $0x10] sm:$0xf]
    %v72 = vld [vmem:[#allocation3 + $0x14] sm:$0xf]
    %v73 = vld [vmem:[#allocation3 + $0x18] sm:$0xf]
    %v74 = vld [vmem:[#allocation3 + $0x1c] sm:$0xf]
    %v75 = vld [vmem:[#allocation3 + $0x20] sm:$0xf]
    %v76 = vld [vmem:[#allocation3 + $0x24] sm:$0xf]
    %v77 = vld [vmem:[#allocation3 + $0x28] sm:$0xf]
    %v78 = vld [vmem:[#allocation3 + $0x2c] sm:$0xf]
    %v79 = vld [vmem:[#allocation3 + $0x30] sm:$0xf]
    %v80 = vld [vmem:[#allocation3 + $0x34] sm:$0xf]
    %v81 = vld [vmem:[#allocation3 + $0x38] sm:$0xf]
    %v82 = vld [vmem:[#allocation3 + $0x3c] sm:$0xf]
    %v83 = vld [vmem:[#allocation3 + $0x40] sm:$0xf]
    %v84 = vld [vmem:[#allocation3 + $0x44] sm:$0xf]
    %v85 = vld [vmem:[#allocation3 + $0x48] sm:$0xf]
    %v86 = vld [vmem:[#allocation3 + $0x4c] sm:$0xf]
    %v87 = vld [vmem:[#allocation3 + $0x50] sm:$0xf]
    %v88 = vld [vmem:[#allocation3 + $0x54] sm:$0xf]
    %v89 = vld [vmem:[#allocation3 + $0x58] sm:$0xf]
    %v90 = vld [vmem:[#allocation3 + $0x5c] sm:$0xf]
    %v91 = vld [vmem:[#allocation3 + $0x60] sm:$0xf]
    %v92 = vld [vmem:[#allocation3 + $0x64] sm:$0xf]
    %v93 = vld [vmem:[#allocation3 + $0x68] sm:$0xf]
    %v94 = vld [vmem:[#allocation3 + $0x6c] sm:$0xf]
    %v95 = vld [vmem:[#allocation3 + $0x70] sm:$0xf]
    %v96 = vld [vmem:[#allocation3 + $0x74] sm:$0xf]
    %v97 = vld [vmem:[#allocation3 + $0x78] sm:$0xf]
    %v98 = vld [vmem:[#allocation3 + $0x7c] sm:$0xf]
    %v99 = vld [vmem:[#allocation3 + $0x80] sm:$0xf]
    %v100 = vld [vmem:[#allocation3 + $0x84] sm:$0xf]
    %v101 = vld [vmem:[#allocation3 + $0x88] sm:$0xf]
    %v102 = vld [vmem:[#allocation3 + $0x8c] sm:$0xf]
    %v103 = vld [vmem:[#allocation3 + $0x90] sm:$0xf]
    %v104 = vld [vmem:[#allocation3 + $0x94] sm:$0xf]
    %v105 = vld [vmem:[#allocation3 + $0x98] sm:$0xf]
    %v106 = vld [vmem:[#allocation3 + $0x9c] sm:$0xf]
    %v107 = vld [vmem:[#allocation3 + $0xa0] sm:$0xf]
    %v108 = vld [vmem:[#allocation3 + $0xa4] sm:$0xf]
    %v109 = vld [vmem:[#allocation3 + $0xa8] sm:$0xf]
    %v110 = vld [vmem:[#allocation3 + $0xac] sm:$0xf]
    %v111 = vld [vmem:[#allocation3 + $0xb0] sm:$0xf]
    %v112 = vld [vmem:[#allocation3 + $0xb4] sm:$0xf]
    %v113 = vld [vmem:[#allocation3 + $0xb8] sm:$0xf]
    %v114 = vld [vmem:[#allocation3 + $0xbc] sm:$0xf]
    %v115 = vld [vmem:[#allocation3 + $0xc0] sm:$0xf]
    %v116 = vld [vmem:[#allocation3 + $0xc4] sm:$0xf]
    %v117 = vld [vmem:[#allocation3 + $0xc8] sm:$0xf]
    %v118 = vld [vmem:[#allocation3 + $0xcc] sm:$0xf]
    %v119 = vld [vmem:[#allocation3 + $0xd0] sm:$0xf]
    %v120 = vld [vmem:[#allocation3 + $0xd4] sm:$0xf]
    %v121 = vld [vmem:[#allocation3 + $0xd8] sm:$0xf]
    %v122 = vld [vmem:[#allocation3 + $0xdc] sm:$0xf]
    %v123 = vld [vmem:[#allocation3 + $0xe0] sm:$0xf]
    %v124 = vld [vmem:[#allocation3 + $0xe4] sm:$0xf]
    %v125 = vld [vmem:[#allocation3 + $0xe8] sm:$0xf]
    %v126 = vld [vmem:[#allocation3 + $0xec] sm:$0xf]
    %v127 = vld [vmem:[#allocation3 + $0xf0] sm:$0xf]
    %v128 = vld [vmem:[#allocation3 + $0xf4] sm:$0xf]
    %v129 = vld [vmem:[#allocation3 + $0xf8] sm:$0xf]
    %v130 = vld [vmem:[#allocation3 + $0xfc] sm:$0xf]
    %v131 = vld [vmem:[#allocation3 + $0x100] sm:$0xf]
    %v132 = vld [vmem:[#allocation3 + $0x104] sm:$0xf]
    %v133 = vld [vmem:[#allocation3 + $0x108] sm:$0xf]
    %v134 = vld [vmem:[#allocation3 + $0x10c] sm:$0xf]
    %v135 = vld [vmem:[#allocation3 + $0x110] sm:$0xf]
    %v136 = vld [vmem:[#allocation3 + $0x114] sm:$0xf]
    %v137 = vld [vmem:[#allocation3 + $0x118] sm:$0xf]
    %v138 = vld [vmem:[#allocation3 + $0x11c] sm:$0xf]
    %v139 = vld [vmem:[#allocation3 + $0x120] sm:$0xf]
    %v140 = vld [vmem:[#allocation3 + $0x124] sm:$0xf]
    %v141 = vld [vmem:[#allocation3 + $0x128] sm:$0xf]
    %v142 = vld [vmem:[#allocation3 + $0x12c] sm:$0xf]
    %v143 = vld [vmem:[#allocation3 + $0x130] sm:$0xf]
    %v144 = vld [vmem:[#allocation3 + $0x134] sm:$0xf]
    %v145 = vld [vmem:[#allocation3 + $0x138] sm:$0xf]
    %v146 = vld [vmem:[#allocation3 + $0x13c] sm:$0xf]
    %v147 = vld [vmem:[#allocation3 + $0x140] sm:$0xf]
    %v148 = vld [vmem:[#allocation3 + $0x144] sm:$0xf]
    %v149 = vld [vmem:[#allocation3 + $0x148] sm:$0xf]
    %v150 = vld [vmem:[#allocation3 + $0x14c] sm:$0xf]
    %v151 = vld [vmem:[#allocation3 + $0x150] sm:$0xf]
    %v152 = vld [vmem:[#allocation3 + $0x154] sm:$0xf]
    %v153 = vld [vmem:[#allocation3 + $0x158] sm:$0xf]
    %v154 = vld [vmem:[#allocation3 + $0x15c] sm:$0xf]
    %v155 = vld [vmem:[#allocation3 + $0x160] sm:$0xf]
    %v156 = vld [vmem:[#allocation3 + $0x164] sm:$0xf]
    %v157 = vld [vmem:[#allocation3 + $0x168] sm:$0xf]
    %v158 = vld [vmem:[#allocation3 + $0x16c] sm:$0xf]
    %v159 = vld [vmem:[#allocation3 + $0x170] sm:$0xf]
    %v160 = vld [vmem:[#allocation3 + $0x174] sm:$0xf]
    %v161 = vld [vmem:[#allocation3 + $0x178] sm:$0xf]
    %v162 = vld [vmem:[#allocation3 + $0x17c] sm:$0xf]
    %v163 = vld [vmem:[#allocation3 + $0x180] sm:$0xf]
    %v164 = vld [vmem:[#allocation3 + $0x184] sm:$0xf]
    %v165 = vld [vmem:[#allocation3 + $0x188] sm:$0xf]
    %v166 = vld [vmem:[#allocation3 + $0x18c] sm:$0xf]
    %v167 = vld [vmem:[#allocation3 + $0x190] sm:$0xf]
    %v168 = vld [vmem:[#allocation3 + $0x194] sm:$0xf]
    %v169 = vld [vmem:[#allocation3 + $0x198] sm:$0xf]
    %v170 = vld [vmem:[#allocation3 + $0x19c] sm:$0xf]
    %v171 = vld [vmem:[#allocation3 + $0x1a0] sm:$0xf]
    %v172 = vld [vmem:[#allocation3 + $0x1a4] sm:$0xf]
    %v173 = vld [vmem:[#allocation3 + $0x1a8] sm:$0xf]
    %v174 = vld [vmem:[#allocation3 + $0x1ac] sm:$0xf]
    %v175 = vld [vmem:[#allocation3 + $0x1b0] sm:$0xf]
    %v176 = vld [vmem:[#allocation3 + $0x1b4] sm:$0xf]
    %v177 = vld [vmem:[#allocation3 + $0x1b8] sm:$0xf]
    %v178 = vld [vmem:[#allocation3 + $0x1bc] sm:$0xf]
    %v179 = vld [vmem:[#allocation3 + $0x1c0] sm:$0xf]
    %v180 = vld [vmem:[#allocation3 + $0x1c4] sm:$0xf]
    %v181 = vld [vmem:[#allocation3 + $0x1c8] sm:$0xf]
    %v182 = vld [vmem:[#allocation3 + $0x1cc] sm:$0xf]
    %v183 = vld [vmem:[#allocation3 + $0x1d0] sm:$0xf]
    %v184 = vld [vmem:[#allocation3 + $0x1d4] sm:$0xf]
    %v185 = vld [vmem:[#allocation3 + $0x1d8] sm:$0xf]
    %v186 = vld [vmem:[#allocation3 + $0x1dc] sm:$0xf]
    %v187 = vld [vmem:[#allocation3 + $0x1e0] sm:$0xf]
    %v188 = vld [vmem:[#allocation3 + $0x1e4] sm:$0xf]
    %v189 = vld [vmem:[#allocation3 + $0x1e8] sm:$0xf]
    %v190 = vld [vmem:[#allocation3 + $0x1ec] sm:$0xf]
    %v191 = vld [vmem:[#allocation3 + $0x1f0] sm:$0xf]
    %v192 = vld [vmem:[#allocation3 + $0x1f4] sm:$0xf]
    %v193 = vld [vmem:[#allocation3 + $0x1f8] sm:$0xf]
    %v194 = vld [vmem:[#allocation3 + $0x1fc] sm:$0xf]
    %v195 = vld [vmem:[#allocation3 + $0x200] sm:$0xf]
    %v196 = vld [vmem:[#allocation3 + $0x204] sm:$0xf]
    %v197 = vld [vmem:[#allocation3 + $0x208] sm:$0xf]
    %v198 = vld [vmem:[#allocation3 + $0x20c] sm:$0xf]
    %v199 = vld [vmem:[#allocation3 + $0x210] sm:$0xf]
    %v200 = vld [vmem:[#allocation3 + $0x214] sm:$0xf]
    %v201 = vld [vmem:[#allocation3 + $0x218] sm:$0xf]
    %v202 = vld [vmem:[#allocation3 + $0x21c] sm:$0xf]
    %v203 = vld [vmem:[#allocation3 + $0x220] sm:$0xf]
    %v204 = vld [vmem:[#allocation3 + $0x224] sm:$0xf]
    %v205 = vld [vmem:[#allocation3 + $0x228] sm:$0xf]
    %v206 = vld [vmem:[#allocation3 + $0x22c] sm:$0xf]
    %v207 = vld [vmem:[#allocation3 + $0x230] sm:$0xf]
    %v208 = vld [vmem:[#allocation3 + $0x234] sm:$0xf]
    %v209 = vld [vmem:[#allocation3 + $0x238] sm:$0xf]
    %v210 = vld [vmem:[#allocation3 + $0x23c] sm:$0xf]
    %v211 = vld [vmem:[#allocation3 + $0x240] sm:$0xf]
    %v212 = vld [vmem:[#allocation3 + $0x244] sm:$0xf]
    %v213 = vld [vmem:[#allocation3 + $0x248] sm:$0xf]
    %v214 = vld [vmem:[#allocation3 + $0x24c] sm:$0xf]
    %v215 = vld [vmem:[#allocation3 + $0x250] sm:$0xf]
    %v216 = vld [vmem:[#allocation3 + $0x254] sm:$0xf]
    %v217 = vld [vmem:[#allocation3 + $0x258] sm:$0xf]
    %v218 = vld [vmem:[#allocation3 + $0x25c] sm:$0xf]
    %v219 = vld [vmem:[#allocation3 + $0x260] sm:$0xf]
    %v220 = vld [vmem:[#allocation3 + $0x264] sm:$0xf]
    %v221 = vld [vmem:[#allocation3 + $0x268] sm:$0xf]
    %v222 = vld [vmem:[#allocation3 + $0x26c] sm:$0xf]
    %v223 = vld [vmem:[#allocation3 + $0x270] sm:$0xf]
    %v224 = vld [vmem:[#allocation3 + $0x274] sm:$0xf]
    %v225 = vld [vmem:[#allocation3 + $0x278] sm:$0xf]
    %v226 = vld [vmem:[#allocation3 + $0x27c] sm:$0xf]
    %v227 = vld [vmem:[#allocation3 + $0x280] sm:$0xf]
    %v228 = vld [vmem:[#allocation3 + $0x284] sm:$0xf]
    %v229 = vld [vmem:[#allocation3 + $0x288] sm:$0xf]
    %v230 = vld [vmem:[#allocation3 + $0x28c] sm:$0xf]
    %v231 = vld [vmem:[#allocation3 + $0x290] sm:$0xf]
    %v232 = vld [vmem:[#allocation3 + $0x294] sm:$0xf]
    %v233 = vld [vmem:[#allocation3 + $0x298] sm:$0xf]
    %v234 = vld [vmem:[#allocation3 + $0x29c] sm:$0xf]
    %v235 = vld [vmem:[#allocation3 + $0x2a0] sm:$0xf]
    %v236 = vld [vmem:[#allocation3 + $0x2a4] sm:$0xf]
    %v237 = vld [vmem:[#allocation3 + $0x2a8] sm:$0xf]
    %v238 = vld [vmem:[#allocation3 + $0x2ac] sm:$0xf]
    %v239 = vld [vmem:[#allocation3 + $0x2b0] sm:$0xf]
    %v240 = vld [vmem:[#allocation3 + $0x2b4] sm:$0xf]
    %v241 = vld [vmem:[#allocation3 + $0x2b8] sm:$0xf]
    %v242 = vld [vmem:[#allocation3 + $0x2bc] sm:$0xf]
    %v243 = vld [vmem:[#allocation3 + $0x2c0] sm:$0xf]
    %v244 = vld [vmem:[#allocation3 + $0x2c4] sm:$0xf]
    %v245 = vld [vmem:[#allocation3 + $0x2c8] sm:$0xf]
    %v246 = vld [vmem:[#allocation3 + $0x2cc] sm:$0xf]
    %v247 = vld [vmem:[#allocation3 + $0x2d0] sm:$0xf]
    %v248 = vld [vmem:[#allocation3 + $0x2d4] sm:$0xf]
    %v249 = vld [vmem:[#allocation3 + $0x2d8] sm:$0xf]
    %v250 = vld [vmem:[#allocation3 + $0x2dc] sm:$0xf]
    %v251 = vld [vmem:[#allocation3 + $0x2e0] sm:$0xf]
    %v252 = vld [vmem:[#allocation3 + $0x2e4] sm:$0xf]
    %v253 = vld [vmem:[#allocation3 + $0x2e8] sm:$0xf]
    %v254 = vld [vmem:[#allocation3 + $0x2ec] sm:$0xf]
    %v255 = vld [vmem:[#allocation3 + $0x2f0] sm:$0xf]
    %v256 = vld [vmem:[#allocation3 + $0x2f4] sm:$0xf]
    %v257 = vld [vmem:[#allocation3 + $0x2f8] sm:$0xf]
    %v258 = vld [vmem:[#allocation3 + $0x2fc] sm:$0xf]
    %v265 = vunpack.c.l.b16 %v61
    %v266 = vunpack.c.h.b16 %v61
    %v267 = vunpack.c.l.b16 %v62
    %v268 = vunpack.c.h.b16 %v62
    %v269 = vunpack.c.l.b16 %v63
    %v270 = vunpack.c.h.b16 %v63
    %v271 = vunpack.c.l.b16 %v64
    %v272 = vunpack.c.h.b16 %v64
    %v273 = vunpack.c.l.b16 %v65
    %v274 = vunpack.c.h.b16 %v65
    %v275 = vunpack.c.l.b16 %v66
    %v276 = vunpack.c.h.b16 %v66
    %v277 = vpack.c.b16 %v265, %v265
    %v278 = vpack.c.b16 %v266, %v266
    %v279 = vpack.c.b16 %v267, %v267
    %v280 = vpack.c.b16 %v268, %v268
    %v281 = vpack.c.b16 %v269, %v269
    %v282 = vpack.c.b16 %v270, %v270
    %v283 = vpack.c.b16 %v271, %v271
    %v284 = vpack.c.b16 %v272, %v272
    %v285 = vpack.c.b16 %v273, %v273
    %v286 = vpack.c.b16 %v274, %v274
    %v287 = vpack.c.b16 %v275, %v275
    %v288 = vpack.c.b16 %v276, %v276
    %v493 = vunpack.c.l.b16 %v67
    %v494 = vunpack.c.l.b16 %v68
    %v495 = vunpack.c.l.b16 %v69
    %v496 = vunpack.c.l.b16 %v70
    %v497 = vunpack.c.l.b16 %v71
    %v498 = vunpack.c.l.b16 %v72
    %v499 = vunpack.c.l.b16 %v73
    %v500 = vunpack.c.l.b16 %v74
    %v501 = vunpack.c.l.b16 %v75
    %v502 = vunpack.c.l.b16 %v76
    %v503 = vunpack.c.l.b16 %v77
    %v504 = vunpack.c.l.b16 %v78
    %v505 = vunpack.c.l.b16 %v79
    %v506 = vunpack.c.l.b16 %v80
    %v507 = vunpack.c.l.b16 %v81
    %v508 = vunpack.c.l.b16 %v82
    %v509 = vunpack.c.l.b16 %v83
    %v510 = vunpack.c.l.b16 %v84
    %v511 = vunpack.c.l.b16 %v85
    %v512 = vunpack.c.l.b16 %v86
    %v513 = vunpack.c.l.b16 %v87
    %v514 = vunpack.c.l.b16 %v88
    %v515 = vunpack.c.l.b16 %v89
    %v516 = vunpack.c.l.b16 %v90
    %v517 = vunpack.c.l.b16 %v91
    %v518 = vunpack.c.l.b16 %v92
    %v519 = vunpack.c.l.b16 %v93
    %v520 = vunpack.c.l.b16 %v94
    %v521 = vunpack.c.l.b16 %v95
    %v522 = vunpack.c.l.b16 %v96
    %v523 = vunpack.c.l.b16 %v97
    %v524 = vunpack.c.l.b16 %v98
    %v525 = vunpack.c.l.b16 %v99
    %v526 = vunpack.c.l.b16 %v100
    %v527 = vunpack.c.l.b16 %v101
    %v528 = vunpack.c.l.b16 %v102
    %v529 = vunpack.c.l.b16 %v103
    %v530 = vunpack.c.l.b16 %v104
    %v531 = vunpack.c.l.b16 %v105
    %v532 = vunpack.c.l.b16 %v106
    %v533 = vunpack.c.l.b16 %v107
    %v534 = vunpack.c.l.b16 %v108
    %v535 = vunpack.c.l.b16 %v109
    %v536 = vunpack.c.l.b16 %v110
    %v537 = vunpack.c.l.b16 %v111
    %v538 = vunpack.c.l.b16 %v112
    %v539 = vunpack.c.l.b16 %v113
    %v540 = vunpack.c.l.b16 %v114
    %v541 = vunpack.c.l.b16 %v115
    %v542 = vunpack.c.l.b16 %v116
    %v543 = vunpack.c.l.b16 %v117
    %v544 = vunpack.c.l.b16 %v118
    %v545 = vunpack.c.l.b16 %v119
    %v546 = vunpack.c.l.b16 %v120
    %v547 = vunpack.c.l.b16 %v121
    %v548 = vunpack.c.l.b16 %v122
    %v549 = vunpack.c.l.b16 %v123
    %v550 = vunpack.c.l.b16 %v124
    %v551 = vunpack.c.l.b16 %v125
    %v552 = vunpack.c.l.b16 %v126
    %v553 = vunpack.c.l.b16 %v127
    %v554 = vunpack.c.l.b16 %v128
    %v555 = vunpack.c.l.b16 %v129
    %v556 = vunpack.c.l.b16 %v130
    %v557 = vunpack.c.l.b16 %v131
    %v558 = vunpack.c.l.b16 %v132
    %v559 = vunpack.c.l.b16 %v133
    %v560 = vunpack.c.l.b16 %v134
    %v561 = vunpack.c.l.b16 %v135
    %v562 = vunpack.c.l.b16 %v136
    %v563 = vunpack.c.l.b16 %v137
    %v564 = vunpack.c.l.b16 %v138
    %v565 = vunpack.c.l.b16 %v139
    %v566 = vunpack.c.l.b16 %v140
    %v567 = vunpack.c.l.b16 %v141
    %v568 = vunpack.c.l.b16 %v142
    %v569 = vunpack.c.l.b16 %v143
    %v570 = vunpack.c.l.b16 %v144
    %v571 = vunpack.c.l.b16 %v145
    %v572 = vunpack.c.l.b16 %v146
    %v573 = vunpack.c.l.b16 %v147
    %v574 = vunpack.c.l.b16 %v148
    %v575 = vunpack.c.l.b16 %v149
    %v576 = vunpack.c.l.b16 %v150
    %v577 = vunpack.c.l.b16 %v151
    %v578 = vunpack.c.l.b16 %v152
    %v579 = vunpack.c.l.b16 %v153
    %v580 = vunpack.c.l.b16 %v154
    %v581 = vunpack.c.l.b16 %v155
    %v582 = vunpack.c.l.b16 %v156
    %v583 = vunpack.c.l.b16 %v157
    %v584 = vunpack.c.l.b16 %v158
    %v585 = vunpack.c.l.b16 %v159
    %v586 = vunpack.c.l.b16 %v160
    %v587 = vunpack.c.l.b16 %v161
    %v588 = vunpack.c.l.b16 %v162
    %v589 = vunpack.c.l.b16 %v163
    %v590 = vunpack.c.l.b16 %v164
    %v591 = vunpack.c.l.b16 %v165
    %v592 = vunpack.c.l.b16 %v166
    %v593 = vunpack.c.l.b16 %v167
    %v594 = vunpack.c.l.b16 %v168
    %v595 = vunpack.c.l.b16 %v169
    %v596 = vunpack.c.l.b16 %v170
    %v597 = vunpack.c.l.b16 %v171
    %v598 = vunpack.c.l.b16 %v172
    %v599 = vunpack.c.l.b16 %v173
    %v600 = vunpack.c.l.b16 %v174
    %v601 = vunpack.c.l.b16 %v175
    %v602 = vunpack.c.l.b16 %v176
    %v603 = vunpack.c.l.b16 %v177
    %v604 = vunpack.c.l.b16 %v178
    %v605 = vunpack.c.l.b16 %v179
    %v606 = vunpack.c.l.b16 %v180
    %v607 = vunpack.c.l.b16 %v181
    %v608 = vunpack.c.l.b16 %v182
    %v609 = vunpack.c.l.b16 %v183
    %v610 = vunpack.c.l.b16 %v184
    %v611 = vunpack.c.l.b16 %v185
    %v612 = vunpack.c.l.b16 %v186
    %v613 = vunpack.c.l.b16 %v187
    %v614 = vunpack.c.l.b16 %v188
    %v615 = vunpack.c.l.b16 %v189
    %v616 = vunpack.c.l.b16 %v190
    %v617 = vunpack.c.l.b16 %v191
    %v618 = vunpack.c.l.b16 %v192
    %v619 = vunpack.c.l.b16 %v193
    %v620 = vunpack.c.l.b16 %v194
    %v621 = vunpack.c.l.b16 %v195
    %v622 = vunpack.c.l.b16 %v196
    %v623 = vunpack.c.l.b16 %v197
    %v624 = vunpack.c.l.b16 %v198
    %v625 = vunpack.c.l.b16 %v199
    %v626 = vunpack.c.l.b16 %v200
    %v627 = vunpack.c.l.b16 %v201
    %v628 = vunpack.c.l.b16 %v202
    %v629 = vunpack.c.l.b16 %v203
    %v630 = vunpack.c.l.b16 %v204
    %v631 = vunpack.c.l.b16 %v205
    %v632 = vunpack.c.l.b16 %v206
    %v633 = vunpack.c.l.b16 %v207
    %v634 = vunpack.c.l.b16 %v208
    %v635 = vunpack.c.l.b16 %v209
    %v636 = vunpack.c.l.b16 %v210
    %v637 = vunpack.c.l.b16 %v211
    %v638 = vunpack.c.l.b16 %v212
    %v639 = vunpack.c.l.b16 %v213
    %v640 = vunpack.c.l.b16 %v214
    %v641 = vunpack.c.l.b16 %v215
    %v642 = vunpack.c.l.b16 %v216
    %v643 = vunpack.c.l.b16 %v217
    %v644 = vunpack.c.l.b16 %v218
    %v645 = vunpack.c.l.b16 %v219
    %v646 = vunpack.c.l.b16 %v220
    %v647 = vunpack.c.l.b16 %v221
    %v648 = vunpack.c.l.b16 %v222
    %v649 = vunpack.c.l.b16 %v223
    %v650 = vunpack.c.l.b16 %v224
    %v651 = vunpack.c.l.b16 %v225
    %v652 = vunpack.c.l.b16 %v226
    %v653 = vunpack.c.l.b16 %v227
    %v654 = vunpack.c.l.b16 %v228
    %v655 = vunpack.c.l.b16 %v229
    %v656 = vunpack.c.l.b16 %v230
    %v657 = vunpack.c.l.b16 %v231
    %v658 = vunpack.c.l.b16 %v232
    %v659 = vunpack.c.l.b16 %v233
    %v660 = vunpack.c.l.b16 %v234
    %v661 = vunpack.c.l.b16 %v235
    %v662 = vunpack.c.l.b16 %v236
    %v663 = vunpack.c.l.b16 %v237
    %v664 = vunpack.c.l.b16 %v238
    %v665 = vunpack.c.l.b16 %v239
    %v666 = vunpack.c.l.b16 %v240
    %v667 = vunpack.c.l.b16 %v241
    %v668 = vunpack.c.l.b16 %v242
    %v669 = vunpack.c.l.b16 %v243
    %v670 = vunpack.c.l.b16 %v244
    %v671 = vunpack.c.l.b16 %v245
    %v672 = vunpack.c.l.b16 %v246
    %v673 = vunpack.c.l.b16 %v247
    %v674 = vunpack.c.l.b16 %v248
    %v675 = vunpack.c.l.b16 %v249
    %v676 = vunpack.c.l.b16 %v250
    %v677 = vunpack.c.l.b16 %v251
    %v678 = vunpack.c.l.b16 %v252
    %v679 = vunpack.c.l.b16 %v253
    %v680 = vunpack.c.l.b16 %v254
    %v681 = vunpack.c.l.b16 %v255
    %v682 = vunpack.c.l.b16 %v256
    %v683 = vunpack.c.l.b16 %v257
    %v684 = vunpack.c.l.b16 %v258
    %v685 = vpack.c.b16 %v494, %v493
    %v686 = vpack.c.b16 %v496, %v495
    %v687 = vpack.c.b16 %v498, %v497
    %v688 = vpack.c.b16 %v500, %v499
    %v689 = vpack.c.b16 %v502, %v501
    %v690 = vpack.c.b16 %v504, %v503
    %v691 = vpack.c.b16 %v506, %v505
    %v692 = vpack.c.b16 %v508, %v507
    %v693 = vpack.c.b16 %v510, %v509
    %v694 = vpack.c.b16 %v512, %v511
    %v695 = vpack.c.b16 %v514, %v513
    %v696 = vpack.c.b16 %v516, %v515
    %v697 = vpack.c.b16 %v518, %v517
    %v698 = vpack.c.b16 %v520, %v519
    %v699 = vpack.c.b16 %v522, %v521
    %v700 = vpack.c.b16 %v524, %v523
    %v701 = vpack.c.b16 %v526, %v525
    %v702 = vpack.c.b16 %v528, %v527
    %v703 = vpack.c.b16 %v530, %v529
    %v704 = vpack.c.b16 %v532, %v531
    %v705 = vpack.c.b16 %v534, %v533
    %v706 = vpack.c.b16 %v536, %v535
    %v707 = vpack.c.b16 %v538, %v537
    %v708 = vpack.c.b16 %v540, %v539
    %v709 = vpack.c.b16 %v542, %v541
    %v710 = vpack.c.b16 %v544, %v543
    %v711 = vpack.c.b16 %v546, %v545
    %v712 = vpack.c.b16 %v548, %v547
    %v713 = vpack.c.b16 %v550, %v549
    %v714 = vpack.c.b16 %v552, %v551
    %v715 = vpack.c.b16 %v554, %v553
    %v716 = vpack.c.b16 %v556, %v555
    %v717 = vpack.c.b16 %v558, %v557
    %v718 = vpack.c.b16 %v560, %v559
    %v719 = vpack.c.b16 %v562, %v561
    %v720 = vpack.c.b16 %v564, %v563
    %v721 = vpack.c.b16 %v566, %v565
    %v722 = vpack.c.b16 %v568, %v567
    %v723 = vpack.c.b16 %v570, %v569
    %v724 = vpack.c.b16 %v572, %v571
    %v725 = vpack.c.b16 %v574, %v573
    %v726 = vpack.c.b16 %v576, %v575
    %v727 = vpack.c.b16 %v578, %v577
    %v728 = vpack.c.b16 %v580, %v579
    %v729 = vpack.c.b16 %v582, %v581
    %v730 = vpack.c.b16 %v584, %v583
    %v731 = vpack.c.b16 %v586, %v585
    %v732 = vpack.c.b16 %v588, %v587
    %v733 = vpack.c.b16 %v590, %v589
    %v734 = vpack.c.b16 %v592, %v591
    %v735 = vpack.c.b16 %v594, %v593
    %v736 = vpack.c.b16 %v596, %v595
    %v737 = vpack.c.b16 %v598, %v597
    %v738 = vpack.c.b16 %v600, %v599
    %v739 = vpack.c.b16 %v602, %v601
    %v740 = vpack.c.b16 %v604, %v603
    %v741 = vpack.c.b16 %v606, %v605
    %v742 = vpack.c.b16 %v608, %v607
    %v743 = vpack.c.b16 %v610, %v609
    %v744 = vpack.c.b16 %v612, %v611
    %v745 = vpack.c.b16 %v614, %v613
    %v746 = vpack.c.b16 %v616, %v615
    %v747 = vpack.c.b16 %v618, %v617
    %v748 = vpack.c.b16 %v620, %v619
    %v749 = vpack.c.b16 %v622, %v621
    %v750 = vpack.c.b16 %v624, %v623
    %v751 = vpack.c.b16 %v626, %v625
    %v752 = vpack.c.b16 %v628, %v627
    %v753 = vpack.c.b16 %v630, %v629
    %v754 = vpack.c.b16 %v632, %v631
    %v755 = vpack.c.b16 %v634, %v633
    %v756 = vpack.c.b16 %v636, %v635
    %v757 = vpack.c.b16 %v638, %v637
    %v758 = vpack.c.b16 %v640, %v639
    %v759 = vpack.c.b16 %v642, %v641
    %v760 = vpack.c.b16 %v644, %v643
    %v761 = vpack.c.b16 %v646, %v645
    %v762 = vpack.c.b16 %v648, %v647
    %v763 = vpack.c.b16 %v650, %v649
    %v764 = vpack.c.b16 %v652, %v651
    %v765 = vpack.c.b16 %v654, %v653
    %v766 = vpack.c.b16 %v656, %v655
    %v767 = vpack.c.b16 %v658, %v657
    %v768 = vpack.c.b16 %v660, %v659
    %v769 = vpack.c.b16 %v662, %v661
    %v770 = vpack.c.b16 %v664, %v663
    %v771 = vpack.c.b16 %v666, %v665
    %v772 = vpack.c.b16 %v668, %v667
    %v773 = vpack.c.b16 %v670, %v669
    %v774 = vpack.c.b16 %v672, %v671
    %v775 = vpack.c.b16 %v674, %v673
    %v776 = vpack.c.b16 %v676, %v675
    %v777 = vpack.c.b16 %v678, %v677
    %v778 = vpack.c.b16 %v680, %v679
    %v779 = vpack.c.b16 %v682, %v681
    %v780 = vpack.c.b16 %v684, %v683
    %877 = vmatprep.subr.bf16.mxu0 0
    %878 = vmatpush1.bf16.msra.mxu0 %v685
    %879 = vmatprep.subr.bf16.mxu0 0
    %880 = vmatpush1.bf16.msra.mxu0 %v686
    %881 = vmatprep.subr.bf16.mxu0 0
    %882 = vmatpush1.bf16.msra.mxu0 %v687
    %883 = vmatprep.subr.bf16.mxu0 0
    %884 = vmatpush1.bf16.msra.mxu0 %v688
    %885 = vmatprep.subr.bf16.mxu0 0
    %886 = vmatpush1.bf16.msra.mxu0 %v689
    %887 = vmatprep.subr.bf16.mxu0 0
    %888 = vmatpush1.bf16.msra.mxu0 %v690
    %889 = vmatprep.subr.bf16.mxu0 0
    %890 = vmatpush1.bf16.msra.mxu0 %v691
    %891 = vmatprep.subr.bf16.mxu0 0
    %892 = vmatpush1.bf16.msra.mxu0 %v692
    %893 = vmatprep.subr.bf16.mxu0 0
    %894 = vmatpush1.bf16.msra.mxu0 %v693
    %895 = vmatprep.subr.bf16.mxu0 0
    %896 = vmatpush1.bf16.msra.mxu0 %v694
    %897 = vmatprep.subr.bf16.mxu0 0
    %898 = vmatpush1.bf16.msra.mxu0 %v695
    %899 = vmatprep.subr.bf16.mxu0 0
    %900 = vmatpush1.bf16.msra.mxu0 %v696
    %901 = vmatprep.subr.bf16.mxu0 0
    %902 = vmatpush1.bf16.msra.mxu0 %v697
    %903 = vmatprep.subr.bf16.mxu0 0
    %904 = vmatpush1.bf16.msra.mxu0 %v698
    %905 = vmatprep.subr.bf16.mxu0 0
    %906 = vmatpush1.bf16.msra.mxu0 %v699
    %907 = vmatprep.subr.bf16.mxu0 0
    %908 = vmatpush1.bf16.msra.mxu0 %v700
    %909 = vmatprep.mubr.bf16.mxu0 %v278
    %910 = vmatmul.mubr.bf16.gmra.mrb[0].mxu0 %v277
    %v911 = vpop.f32.mrb[0].mxu0
    %v912 = vadd.f32 0.0, %v911
    %v913 = vpop.f32.mrb[0].mxu0
    %v914 = vpop.f32.mrb[0].mxu0
    %v915 = vpop.f32.mrb[0].mxu0
    %916 = vdwg.mxu0
    %917 = vmatprep.subr.bf16.mxu0 0
    %918 = vmatpush1.bf16.msra.mxu0 %v701
    %919 = vmatprep.subr.bf16.mxu0 0
    %920 = vmatpush1.bf16.msra.mxu0 %v702
    %921 = vmatprep.subr.bf16.mxu0 0
    %922 = vmatpush1.bf16.msra.mxu0 %v703
    %923 = vmatprep.subr.bf16.mxu0 0
    %924 = vmatpush1.bf16.msra.mxu0 %v704
    %925 = vmatprep.subr.bf16.mxu0 0
    %926 = vmatpush1.bf16.msra.mxu0 %v705
    %927 = vmatprep.subr.bf16.mxu0 0
    %928 = vmatpush1.bf16.msra.mxu0 %v706
    %929 = vmatprep.subr.bf16.mxu0 0
    %930 = vmatpush1.bf16.msra.mxu0 %v707
    %931 = vmatprep.subr.bf16.mxu0 0
    %932 = vmatpush1.bf16.msra.mxu0 %v708
    %933 = vmatprep.subr.bf16.mxu0 0
    %934 = vmatpush1.bf16.msra.mxu0 %v709
    %935 = vmatprep.subr.bf16.mxu0 0
    %936 = vmatpush1.bf16.msra.mxu0 %v710
    %937 = vmatprep.subr.bf16.mxu0 0
    %938 = vmatpush1.bf16.msra.mxu0 %v711
    %939 = vmatprep.subr.bf16.mxu0 0
    %940 = vmatpush1.bf16.msra.mxu0 %v712
    %941 = vmatprep.subr.bf16.mxu0 0
    %942 = vmatpush1.bf16.msra.mxu0 %v713
    %943 = vmatprep.subr.bf16.mxu0 0
    %944 = vmatpush1.bf16.msra.mxu0 %v714
    %945 = vmatprep.subr.bf16.mxu0 0
    %946 = vmatpush1.bf16.msra.mxu0 %v715
    %947 = vmatprep.subr.bf16.mxu0 0
    %948 = vmatpush1.bf16.msra.mxu0 %v716
    %949 = vmatprep.mubr.bf16.mxu0 %v280
    %950 = vmatmul.mubr.bf16.gmra.mrb[0].mxu0 %v279
    %v951 = vpop.f32.mrb[0].mxu0
    %v952 = vadd.f32 %v912, %v951
    %v953 = vpop.f32.mrb[0].mxu0
    %v954 = vpop.f32.mrb[0].mxu0
    %v955 = vpop.f32.mrb[0].mxu0
    %956 = vdwg.mxu0
    %957 = vmatprep.subr.bf16.mxu0 0
    %958 = vmatpush1.bf16.msra.mxu0 %v717
    %959 = vmatprep.subr.bf16.mxu0 0
    %960 = vmatpush1.bf16.msra.mxu0 %v718
    %961 = vmatprep.subr.bf16.mxu0 0
    %962 = vmatpush1.bf16.msra.mxu0 %v719
    %963 = vmatprep.subr.bf16.mxu0 0
    %964 = vmatpush1.bf16.msra.mxu0 %v720
    %965 = vmatprep.subr.bf16.mxu0 0
    %966 = vmatpush1.bf16.msra.mxu0 %v721
    %967 = vmatprep.subr.bf16.mxu0 0
    %968 = vmatpush1.bf16.msra.mxu0 %v722
    %969 = vmatprep.subr.bf16.mxu0 0
    %970 = vmatpush1.bf16.msra.mxu0 %v723
    %971 = vmatprep.subr.bf16.mxu0 0
    %972 = vmatpush1.bf16.msra.mxu0 %v724
    %973 = vmatprep.subr.bf16.mxu0 0
    %974 = vmatpush1.bf16.msra.mxu0 %v725
    %975 = vmatprep.subr.bf16.mxu0 0
    %976 = vmatpush1.bf16.msra.mxu0 %v726
    %977 = vmatprep.subr.bf16.mxu0 0
    %978 = vmatpush1.bf16.msra.mxu0 %v727
    %979 = vmatprep.subr.bf16.mxu0 0
    %980 = vmatpush1.bf16.msra.mxu0 %v728
    %981 = vmatprep.subr.bf16.mxu0 0
    %982 = vmatpush1.bf16.msra.mxu0 %v729
    %983 = vmatprep.subr.bf16.mxu0 0
    %984 = vmatpush1.bf16.msra.mxu0 %v730
    %985 = vmatprep.subr.bf16.mxu0 0
    %986 = vmatpush1.bf16.msra.mxu0 %v731
    %987 = vmatprep.subr.bf16.mxu0 0
    %988 = vmatpush1.bf16.msra.mxu0 %v732
    %989 = vmatprep.mubr.bf16.mxu0 %v282
    %990 = vmatmul.mubr.bf16.gmra.mrb[0].mxu0 %v281
    %v991 = vpop.f32.mrb[0].mxu0
    %v992 = vadd.f32 %v952, %v991
    %v993 = vpop.f32.mrb[0].mxu0
    %v994 = vpop.f32.mrb[0].mxu0
    %v995 = vpop.f32.mrb[0].mxu0
    %996 = vdwg.mxu0
    %997 = vmatprep.subr.bf16.mxu0 0
    %998 = vmatpush1.bf16.msra.mxu0 %v733
    %999 = vmatprep.subr.bf16.mxu0 0
    %1000 = vmatpush1.bf16.msra.mxu0 %v734
    %1001 = vmatprep.subr.bf16.mxu0 0
    %1002 = vmatpush1.bf16.msra.mxu0 %v735
    %1003 = vmatprep.subr.bf16.mxu0 0
    %1004 = vmatpush1.bf16.msra.mxu0 %v736
    %1005 = vmatprep.subr.bf16.mxu0 0
    %1006 = vmatpush1.bf16.msra.mxu0 %v737
    %1007 = vmatprep.subr.bf16.mxu0 0
    %1008 = vmatpush1.bf16.msra.mxu0 %v738
    %1009 = vmatprep.subr.bf16.mxu0 0
    %1010 = vmatpush1.bf16.msra.mxu0 %v739
    %1011 = vmatprep.subr.bf16.mxu0 0
    %1012 = vmatpush1.bf16.msra.mxu0 %v740
    %1013 = vmatprep.subr.bf16.mxu0 0
    %1014 = vmatpush1.bf16.msra.mxu0 %v741
    %1015 = vmatprep.subr.bf16.mxu0 0
    %1016 = vmatpush1.bf16.msra.mxu0 %v742
    %1017 = vmatprep.subr.bf16.mxu0 0
    %1018 = vmatpush1.bf16.msra.mxu0 %v743
    %1019 = vmatprep.subr.bf16.mxu0 0
    %1020 = vmatpush1.bf16.msra.mxu0 %v744
    %1021 = vmatprep.subr.bf16.mxu0 0
    %1022 = vmatpush1.bf16.msra.mxu0 %v745
    %1023 = vmatprep.subr.bf16.mxu0 0
    %1024 = vmatpush1.bf16.msra.mxu0 %v746
    %1025 = vmatprep.subr.bf16.mxu0 0
    %1026 = vmatpush1.bf16.msra.mxu0 %v747
    %1027 = vmatprep.subr.bf16.mxu0 0
    %1028 = vmatpush1.bf16.msra.mxu0 %v748
    %1029 = vmatprep.mubr.bf16.mxu0 %v284
    %1030 = vmatmul.mubr.bf16.gmra.mrb[0].mxu0 %v283
    %v1031 = vpop.f32.mrb[0].mxu0
    %v1032 = vadd.f32 %v992, %v1031
    %v1033 = vpop.f32.mrb[0].mxu0
    %v1034 = vpop.f32.mrb[0].mxu0
    %v1035 = vpop.f32.mrb[0].mxu0
    %1036 = vdwg.mxu0
    %1037 = vmatprep.subr.bf16.mxu0 0
    %1038 = vmatpush1.bf16.msra.mxu0 %v749
    %1039 = vmatprep.subr.bf16.mxu0 0
    %1040 = vmatpush1.bf16.msra.mxu0 %v750
    %1041 = vmatprep.subr.bf16.mxu0 0
    %1042 = vmatpush1.bf16.msra.mxu0 %v751
    %1043 = vmatprep.subr.bf16.mxu0 0
    %1044 = vmatpush1.bf16.msra.mxu0 %v752
    %1045 = vmatprep.subr.bf16.mxu0 0
    %1046 = vmatpush1.bf16.msra.mxu0 %v753
    %1047 = vmatprep.subr.bf16.mxu0 0
    %1048 = vmatpush1.bf16.msra.mxu0 %v754
    %1049 = vmatprep.subr.bf16.mxu0 0
    %1050 = vmatpush1.bf16.msra.mxu0 %v755
    %1051 = vmatprep.subr.bf16.mxu0 0
    %1052 = vmatpush1.bf16.msra.mxu0 %v756
    %1053 = vmatprep.subr.bf16.mxu0 0
    %1054 = vmatpush1.bf16.msra.mxu0 %v757
    %1055 = vmatprep.subr.bf16.mxu0 0
    %1056 = vmatpush1.bf16.msra.mxu0 %v758
    %1057 = vmatprep.subr.bf16.mxu0 0
    %1058 = vmatpush1.bf16.msra.mxu0 %v759
    %1059 = vmatprep.subr.bf16.mxu0 0
    %1060 = vmatpush1.bf16.msra.mxu0 %v760
    %1061 = vmatprep.subr.bf16.mxu0 0
    %1062 = vmatpush1.bf16.msra.mxu0 %v761
    %1063 = vmatprep.subr.bf16.mxu0 0
    %1064 = vmatpush1.bf16.msra.mxu0 %v762
    %1065 = vmatprep.subr.bf16.mxu0 0
    %1066 = vmatpush1.bf16.msra.mxu0 %v763
    %1067 = vmatprep.subr.bf16.mxu0 0
    %1068 = vmatpush1.bf16.msra.mxu0 %v764
    %1069 = vmatprep.mubr.bf16.mxu0 %v286
    %1070 = vmatmul.mubr.bf16.gmra.mrb[0].mxu0 %v285
    %v1071 = vpop.f32.mrb[0].mxu0
    %v1072 = vadd.f32 %v1032, %v1071
    %v1073 = vpop.f32.mrb[0].mxu0
    %v1074 = vpop.f32.mrb[0].mxu0
    %v1075 = vpop.f32.mrb[0].mxu0
    %1076 = vdwg.mxu0
    %1077 = vmatprep.subr.bf16.mxu0 0
    %1078 = vmatpush1.bf16.msra.mxu0 %v765
    %1079 = vmatprep.subr.bf16.mxu0 0
    %1080 = vmatpush1.bf16.msra.mxu0 %v766
    %1081 = vmatprep.subr.bf16.mxu0 0
    %1082 = vmatpush1.bf16.msra.mxu0 %v767
    %1083 = vmatprep.subr.bf16.mxu0 0
    %1084 = vmatpush1.bf16.msra.mxu0 %v768
    %1085 = vmatprep.subr.bf16.mxu0 0
    %1086 = vmatpush1.bf16.msra.mxu0 %v769
    %1087 = vmatprep.subr.bf16.mxu0 0
    %1088 = vmatpush1.bf16.msra.mxu0 %v770
    %1089 = vmatprep.subr.bf16.mxu0 0
    %1090 = vmatpush1.bf16.msra.mxu0 %v771
    %1091 = vmatprep.subr.bf16.mxu0 0
    %1092 = vmatpush1.bf16.msra.mxu0 %v772
    %1093 = vmatprep.subr.bf16.mxu0 0
    %1094 = vmatpush1.bf16.msra.mxu0 %v773
    %1095 = vmatprep.subr.bf16.mxu0 0
    %1096 = vmatpush1.bf16.msra.mxu0 %v774
    %1097 = vmatprep.subr.bf16.mxu0 0
    %1098 = vmatpush1.bf16.msra.mxu0 %v775
    %1099 = vmatprep.subr.bf16.mxu0 0
    %1100 = vmatpush1.bf16.msra.mxu0 %v776
    %1101 = vmatprep.subr.bf16.mxu0 0
    %1102 = vmatpush1.bf16.msra.mxu0 %v777
    %1103 = vmatprep.subr.bf16.mxu0 0
    %1104 = vmatpush1.bf16.msra.mxu0 %v778
    %1105 = vmatprep.subr.bf16.mxu0 0
    %1106 = vmatpush1.bf16.msra.mxu0 %v779
    %1107 = vmatprep.subr.bf16.mxu0 0
    %1108 = vmatpush1.bf16.msra.mxu0 %v780
    %1109 = vmatprep.mubr.bf16.mxu0 %v288
    %1110 = vmatmul.mubr.bf16.gmra.mrb[0].mxu0 %v287
    %v1111 = vpop.f32.mrb[0].mxu0
    %v1112 = vadd.f32 %v1072, %v1111
    %v1113 = vpop.f32.mrb[0].mxu0
    %v1114 = vpop.f32.mrb[0].mxu0
    %v1115 = vpop.f32.mrb[0].mxu0
    %1116 = vdwg.mxu0
    %v1117 = vadd.f32 %v60, %v1112
    %1118 = vst [vmem:[#allocation2] sm:$0xff] %v1117
    // Predicated region
    $region42: #{mlp_forward.1} parent=1 // pred_check
      %p1119 = pneg %p55
    $region43: #{mlp_forward.1} parent=1 // pred_check_branch
      %1121 = sbr.rel (%p1119) target = $region45
    $region44: #{mlp_forward.1} parent=1 // pred_region
      %v1122 = vld [vmem:[#allocation2] sm:$0xff]
      %v1123 = vld [vmem:[%s2] sm:$0x1]
      %v1125 = vlaneseq
      %v1126 = vshrl.u32 %v1125, 7
      %v1127 = vsub.s32 0, %v1126
      %v1128 = vrot.slane %v1123, %v1127
      %v1130 = vadd.f32 %v1122, %v1128
      %v1131 = vmax.f32 %v1130, 0.0
      %v1132 = vpack.c.bf16 %v1131, %v1131
      %v1133 = vld [vmem:[%s3] sm:$0xf]
      %v1134 = vld [vmem:[%s3 + $0x4] sm:$0xf]
      %v1135 = vld [vmem:[%s3 + $0x8] sm:$0xf]
      %v1136 = vld [vmem:[%s3 + $0xc] sm:$0xf]
      %v1137 = vld [vmem:[%s3 + $0x10] sm:$0xf]
      %v1138 = vld [vmem:[%s3 + $0x14] sm:$0xf]
      %v1139 = vld [vmem:[%s3 + $0x18] sm:$0xf]
      %v1140 = vld [vmem:[%s3 + $0x1c] sm:$0xf]
      %v1141 = vld [vmem:[%s3 + $0x20] sm:$0xf]
      %v1142 = vld [vmem:[%s3 + $0x24] sm:$0xf]
      %v1143 = vld [vmem:[%s3 + $0x28] sm:$0xf]
      %v1144 = vld [vmem:[%s3 + $0x2c] sm:$0xf]
      %v1145 = vld [vmem:[%s3 + $0x30] sm:$0xf]
      %v1146 = vld [vmem:[%s3 + $0x34] sm:$0xf]
      %v1147 = vld [vmem:[%s3 + $0x38] sm:$0xf]
      %v1148 = vld [vmem:[%s3 + $0x3c] sm:$0xf]
      %v1149 = vld [vmem:[%s4] sm:$0x1]
      %v1151 = vlaneseq
      %v1152 = vshrl.u32 %v1151, 7
      %v1153 = vsub.s32 0, %v1152
      %v1154 = vrot.slane %v1149, %v1153
      %v1172 = vunpack.c.l.b16 %v1133
      %v1173 = vunpack.c.l.b16 %v1134
      %v1174 = vunpack.c.l.b16 %v1135
      %v1175 = vunpack.c.l.b16 %v1136
      %v1176 = vunpack.c.l.b16 %v1137
      %v1177 = vunpack.c.l.b16 %v1138
      %v1178 = vunpack.c.l.b16 %v1139
      %v1179 = vunpack.c.l.b16 %v1140
      %v1180 = vunpack.c.l.b16 %v1141
      %v1181 = vunpack.c.l.b16 %v1142
      %v1182 = vunpack.c.l.b16 %v1143
      %v1183 = vunpack.c.l.b16 %v1144
      %v1184 = vunpack.c.l.b16 %v1145
      %v1185 = vunpack.c.l.b16 %v1146
      %v1186 = vunpack.c.l.b16 %v1147
      %v1187 = vunpack.c.l.b16 %v1148
      %v1188 = vpack.c.b16 %v1173, %v1172
      %v1189 = vpack.c.b16 %v1175, %v1174
      %v1190 = vpack.c.b16 %v1177, %v1176
      %v1191 = vpack.c.b16 %v1179, %v1178
      %v1192 = vpack.c.b16 %v1181, %v1180
      %v1193 = vpack.c.b16 %v1183, %v1182
      %v1194 = vpack.c.b16 %v1185, %v1184
      %v1195 = vpack.c.b16 %v1187, %v1186
      %1204 = vmatprep.subr.bf16.mxu0 0
      %1205 = vmatpush1.bf16.msra.mxu0 %v1188
      %1206 = vmatprep.subr.bf16.mxu0 0
      %1207 = vmatpush1.bf16.msra.mxu0 %v1189
      %1208 = vmatprep.subr.bf16.mxu0 0
      %1209 = vmatpush1.bf16.msra.mxu0 %v1190
      %1210 = vmatprep.subr.bf16.mxu0 0
      %1211 = vmatpush1.bf16.msra.mxu0 %v1191
      %1212 = vmatprep.subr.bf16.mxu0 0
      %1213 = vmatpush1.bf16.msra.mxu0 %v1192
      %1214 = vmatprep.subr.bf16.mxu0 0
      %1215 = vmatpush1.bf16.msra.mxu0 %v1193
      %1216 = vmatprep.subr.bf16.mxu0 0
      %1217 = vmatpush1.bf16.msra.mxu0 %v1194
      %1218 = vmatprep.subr.bf16.mxu0 0
      %1219 = vmatpush1.bf16.msra.mxu0 %v1195
      %1220 = vmatprep.subr.bf16.mxu0 0
      %1221 = vmatpush1.bf16.msra.mxu0 0
      %1222 = vmatprep.subr.bf16.mxu0 0
      %1223 = vmatpush1.bf16.msra.mxu0 0
      %1224 = vmatprep.subr.bf16.mxu0 0
      %1225 = vmatpush1.bf16.msra.mxu0 0
      %1226 = vmatprep.subr.bf16.mxu0 0
      %1227 = vmatpush1.bf16.msra.mxu0 0
      %1228 = vmatprep.subr.bf16.mxu0 0
      %1229 = vmatpush1.bf16.msra.mxu0 0
      %1230 = vmatprep.subr.bf16.mxu0 0
      %1231 = vmatpush1.bf16.msra.mxu0 0
      %1232 = vmatprep.subr.bf16.mxu0 0
      %1233 = vmatpush1.bf16.msra.mxu0 0
      %1234 = vmatprep.subr.bf16.mxu0 0
      %1235 = vmatpush1.bf16.msra.mxu0 0
      %1236 = vmatprep.mubr.bf16.mxu0 0
      %1237 = vmatmul.mubr.bf16.gmra.mrb[0].mxu0 %v1132
      %v1238 = vpop.f32.mrb[0].mxu0
      %v1239 = vadd.f32 %v1154, %v1238
      %v1240 = vpop.f32.mrb[0].mxu0
      %v1241 = vpop.f32.mrb[0].mxu0
      %v1242 = vpop.f32.mrb[0].mxu0
      %1243 = vdwg.mxu0
      %v1244 = vmax.f32 %v1239, 0.0
      %v1245 = vpack.c.bf16 %v1244, %v1244
      %v1246 = vld [vmem:[#allocation5] sm:$0xff]
      %v1247 = vld [vmem:[#allocation5 + $0x8] sm:$0xff]
      %v1248 = vld [vmem:[#allocation5 + $0x10] sm:$0xff]
      %v1249 = vld [vmem:[#allocation5 + $0x18] sm:$0xff]
      %v1250 = vld [vmem:[#allocation5 + $0x20] sm:$0xff]
      %v1251 = vld [vmem:[#allocation5 + $0x28] sm:$0xff]
      %v1252 = vld [vmem:[#allocation5 + $0x30] sm:$0xff]
      %v1253 = vld [vmem:[#allocation5 + $0x38] sm:$0xff]
      %v1254 = vld [vmem:[#allocation5 + $0x40] sm:$0xff]
      %v1255 = vld [vmem:[#allocation5 + $0x48] sm:$0xff]
      %v1256 = vld [vmem:[#allocation5 + $0x50] sm:$0xff]
      %v1257 = vld [vmem:[#allocation5 + $0x58] sm:$0xff]
      %v1258 = vld [vmem:[#allocation5 + $0x60] sm:$0xff]
      %v1259 = vld [vmem:[#allocation5 + $0x68] sm:$0xff]
      %v1260 = vld [vmem:[#allocation5 + $0x70] sm:$0xff]
      %v1261 = vld [vmem:[#allocation5 + $0x78] sm:$0xff]
      %v1262 = vld [vmem:[#allocation5 + $0x80] sm:$0xff]
      %v1263 = vld [vmem:[#allocation5 + $0x88] sm:$0xff]
      %v1264 = vld [vmem:[#allocation5 + $0x90] sm:$0xff]
      %v1265 = vld [vmem:[#allocation5 + $0x98] sm:$0xff]
      %v1266 = vld [vmem:[#allocation5 + $0xa0] sm:$0xff]
      %v1267 = vld [vmem:[#allocation5 + $0xa8] sm:$0xff]
      %v1268 = vld [vmem:[#allocation5 + $0xb0] sm:$0xff]
      %v1269 = vld [vmem:[#allocation5 + $0xb8] sm:$0xff]
      %v1270 = vld [vmem:[#allocation5 + $0xc0] sm:$0xff]
      %v1271 = vld [vmem:[#allocation5 + $0xc8] sm:$0xff]
      %v1272 = vld [vmem:[#allocation5 + $0xd0] sm:$0xff]
      %v1273 = vld [vmem:[#allocation5 + $0xd8] sm:$0xff]
      %v1274 = vld [vmem:[#allocation5 + $0xe0] sm:$0xff]
      %v1275 = vld [vmem:[#allocation5 + $0xe8] sm:$0xff]
      %v1276 = vld [vmem:[#allocation5 + $0xf0] sm:$0xff]
      %v1277 = vld [vmem:[#allocation5 + $0xf8] sm:$0xff]
      %v1278 = vld [vmem:[#allocation5 + $0x100] sm:$0xff]
      %v1279 = vld [vmem:[#allocation5 + $0x108] sm:$0xff]
      %v1280 = vld [vmem:[#allocation5 + $0x110] sm:$0xff]
      %v1281 = vld [vmem:[#allocation5 + $0x118] sm:$0xff]
      %v1282 = vld [vmem:[#allocation5 + $0x120] sm:$0xff]
      %v1283 = vld [vmem:[#allocation5 + $0x128] sm:$0xff]
      %v1284 = vld [vmem:[#allocation5 + $0x130] sm:$0xff]
      %v1285 = vld [vmem:[#allocation5 + $0x138] sm:$0xff]
      %v1286 = vld [vmem:[#allocation5 + $0x140] sm:$0xff]
      %v1287 = vld [vmem:[#allocation5 + $0x148] sm:$0xff]
      %v1288 = vld [vmem:[#allocation5 + $0x150] sm:$0xff]
      %v1289 = vld [vmem:[#allocation5 + $0x158] sm:$0xff]
      %v1290 = vld [vmem:[#allocation5 + $0x160] sm:$0xff]
      %v1291 = vld [vmem:[#allocation5 + $0x168] sm:$0xff]
      %v1292 = vld [vmem:[#allocation5 + $0x170] sm:$0xff]
      %v1293 = vld [vmem:[#allocation5 + $0x178] sm:$0xff]
      %v1294 = vld [vmem:[%s6] sm:$0x3f]
      %v1296 = vlaneseq
      %v1297 = vshrl.u32 %v1296, 7
      %v1298 = vsub.s32 0, %v1297
      %v1299 = vrot.slane %v1294, %v1298
      %v1300 = vlaneseq
      %v1301 = vshrl.u32 %v1300, 7
      %v1302 = vsub.s32 1, %v1301
      %v1303 = vrot.slane %v1294, %v1302
      %v1304 = vlaneseq
      %v1305 = vshrl.u32 %v1304, 7
      %v1306 = vsub.s32 2, %v1305
      %v1307 = vrot.slane %v1294, %v1306
      %v1308 = vlaneseq
      %v1309 = vshrl.u32 %v1308, 7
      %v1310 = vsub.s32 3, %v1309
      %v1311 = vrot.slane %v1294, %v1310
      %v1312 = vlaneseq
      %v1313 = vshrl.u32 %v1312, 7
      %v1314 = vsub.s32 4, %v1313
      %v1315 = vrot.slane %v1294, %v1314
      %v1316 = vlaneseq
      %v1317 = vshrl.u32 %v1316, 7
      %v1318 = vsub.s32 5, %v1317
      %v1319 = vrot.slane %v1294, %v1318
      %v1374 = vunpack.c.l.b16 %v1246
      %v1375 = vunpack.c.h.b16 %v1246
      %v1376 = vunpack.c.l.b16 %v1247
      %v1377 = vunpack.c.h.b16 %v1247
      %v1378 = vunpack.c.l.b16 %v1248
      %v1379 = vunpack.c.h.b16 %v1248
      %v1380 = vunpack.c.l.b16 %v1249
      %v1381 = vunpack.c.h.b16 %v1249
      %v1382 = vunpack.c.l.b16 %v1250
      %v1383 = vunpack.c.h.b16 %v1250
      %v1384 = vunpack.c.l.b16 %v1251
      %v1385 = vunpack.c.h.b16 %v1251
      %v1386 = vunpack.c.l.b16 %v1252
      %v1387 = vunpack.c.h.b16 %v1252
      %v1388 = vunpack.c.l.b16 %v1253
      %v1389 = vunpack.c.h.b16 %v1253
      %v1390 = vunpack.c.l.b16 %v1254
      %v1391 = vunpack.c.h.b16 %v1254
      %v1392 = vunpack.c.l.b16 %v1255
      %v1393 = vunpack.c.h.b16 %v1255
      %v1394 = vunpack.c.l.b16 %v1256
      %v1395 = vunpack.c.h.b16 %v1256
      %v1396 = vunpack.c.l.b16 %v1257
      %v1397 = vunpack.c.h.b16 %v1257
      %v1398 = vunpack.c.l.b16 %v1258
      %v1399 = vunpack.c.h.b16 %v1258
      %v1400 = vunpack.c.l.b16 %v1259
      %v1401 = vunpack.c.h.b16 %v1259
      %v1402 = vunpack.c.l.b16 %v1260
      %v1403 = vunpack.c.h.b16 %v1260
      %v1404 = vunpack.c.l.b16 %v1261
      %v1405 = vunpack.c.h.b16 %v1261
      %v1406 = vunpack.c.l.b16 %v1262
      %v1407 = vunpack.c.h.b16 %v1262
      %v1408 = vunpack.c.l.b16 %v1263
      %v1409 = vunpack.c.h.b16 %v1263
      %v1410 = vunpack.c.l.b16 %v1264
      %v1411 = vunpack.c.h.b16 %v1264
      %v1412 = vunpack.c.l.b16 %v1265
      %v1413 = vunpack.c.h.b16 %v1265
      %v1414 = vunpack.c.l.b16 %v1266
      %v1415 = vunpack.c.h.b16 %v1266
      %v1416 = vunpack.c.l.b16 %v1267
      %v1417 = vunpack.c.h.b16 %v1267
      %v1418 = vunpack.c.l.b16 %v1268
      %v1419 = vunpack.c.h.b16 %v1268
      %v1420 = vunpack.c.l.b16 %v1269
      %v1421 = vunpack.c.h.b16 %v1269
      %v1422 = vunpack.c.l.b16 %v1270
      %v1423 = vunpack.c.h.b16 %v1270
      %v1424 = vunpack.c.l.b16 %v1271
      %v1425 = vunpack.c.h.b16 %v1271
      %v1426 = vunpack.c.l.b16 %v1272
      %v1427 = vunpack.c.h.b16 %v1272
      %v1428 = vunpack.c.l.b16 %v1273
      %v1429 = vunpack.c.h.b16 %v1273
      %v1430 = vunpack.c.l.b16 %v1274
      %v1431 = vunpack.c.h.b16 %v1274
      %v1432 = vunpack.c.l.b16 %v1275
      %v1433 = vunpack.c.h.b16 %v1275
      %v1434 = vunpack.c.l.b16 %v1276
      %v1435 = vunpack.c.h.b16 %v1276
      %v1436 = vunpack.c.l.b16 %v1277
      %v1437 = vunpack.c.h.b16 %v1277
      %v1438 = vunpack.c.l.b16 %v1278
      %v1439 = vunpack.c.h.b16 %v1278
      %v1440 = vunpack.c.l.b16 %v1279
      %v1441 = vunpack.c.h.b16 %v1279
      %v1442 = vunpack.c.l.b16 %v1280
      %v1443 = vunpack.c.h.b16 %v1280
      %v1444 = vunpack.c.l.b16 %v1281
      %v1445 = vunpack.c.h.b16 %v1281
      %v1446 = vunpack.c.l.b16 %v1282
      %v1447 = vunpack.c.h.b16 %v1282
      %v1448 = vunpack.c.l.b16 %v1283
      %v1449 = vunpack.c.h.b16 %v1283
      %v1450 = vunpack.c.l.b16 %v1284
      %v1451 = vunpack.c.h.b16 %v1284
      %v1452 = vunpack.c.l.b16 %v1285
      %v1453 = vunpack.c.h.b16 %v1285
      %v1454 = vunpack.c.l.b16 %v1286
      %v1455 = vunpack.c.h.b16 %v1286
      %v1456 = vunpack.c.l.b16 %v1287
      %v1457 = vunpack.c.h.b16 %v1287
      %v1458 = vunpack.c.l.b16 %v1288
      %v1459 = vunpack.c.h.b16 %v1288
      %v1460 = vunpack.c.l.b16 %v1289
      %v1461 = vunpack.c.h.b16 %v1289
      %v1462 = vunpack.c.l.b16 %v1290
      %v1463 = vunpack.c.h.b16 %v1290
      %v1464 = vunpack.c.l.b16 %v1291
      %v1465 = vunpack.c.h.b16 %v1291
      %v1466 = vunpack.c.l.b16 %v1292
      %v1467 = vunpack.c.h.b16 %v1292
      %v1468 = vunpack.c.l.b16 %v1293
      %v1469 = vunpack.c.h.b16 %v1293
      %v1470 = vpack.c.b16 %v1380, %v1374
      %v1471 = vpack.c.b16 %v1381, %v1375
      %v1472 = vpack.c.b16 %v1382, %v1376
      %v1473 = vpack.c.b16 %v1383, %v1377
      %v1474 = vpack.c.b16 %v1384, %v1378
      %v1475 = vpack.c.b16 %v1385, %v1379
      %v1476 = vpack.c.b16 %v1392, %v1386
      %v1477 = vpack.c.b16 %v1393, %v1387
      %v1478 = vpack.c.b16 %v1394, %v1388
      %v1479 = vpack.c.b16 %v1395, %v1389
      %v1480 = vpack.c.b16 %v1396, %v1390
      %v1481 = vpack.c.b16 %v1397, %v1391
      %v1482 = vpack.c.b16 %v1404, %v1398
      %v1483 = vpack.c.b16 %v1405, %v1399
      %v1484 = vpack.c.b16 %v1406, %v1400
      %v1485 = vpack.c.b16 %v1407, %v1401
      %v1486 = vpack.c.b16 %v1408, %v1402
      %v1487 = vpack.c.b16 %v1409, %v1403
      %v1488 = vpack.c.b16 %v1416, %v1410
      %v1489 = vpack.c.b16 %v1417, %v1411
      %v1490 = vpack.c.b16 %v1418, %v1412
      %v1491 = vpack.c.b16 %v1419, %v1413
      %v1492 = vpack.c.b16 %v1420, %v1414
      %v1493 = vpack.c.b16 %v1421, %v1415
      %v1494 = vpack.c.b16 %v1428, %v1422
      %v1495 = vpack.c.b16 %v1429, %v1423
      %v1496 = vpack.c.b16 %v1430, %v1424
      %v1497 = vpack.c.b16 %v1431, %v1425
      %v1498 = vpack.c.b16 %v1432, %v1426
      %v1499 = vpack.c.b16 %v1433, %v1427
      %v1500 = vpack.c.b16 %v1440, %v1434
      %v1501 = vpack.c.b16 %v1441, %v1435
      %v1502 = vpack.c.b16 %v1442, %v1436
      %v1503 = vpack.c.b16 %v1443, %v1437
      %v1504 = vpack.c.b16 %v1444, %v1438
      %v1505 = vpack.c.b16 %v1445, %v1439
      %v1506 = vpack.c.b16 %v1452, %v1446
      %v1507 = vpack.c.b16 %v1453, %v1447
      %v1508 = vpack.c.b16 %v1454, %v1448
      %v1509 = vpack.c.b16 %v1455, %v1449
      %v1510 = vpack.c.b16 %v1456, %v1450
      %v1511 = vpack.c.b16 %v1457, %v1451
      %v1512 = vpack.c.b16 %v1464, %v1458
      %v1513 = vpack.c.b16 %v1465, %v1459
      %v1514 = vpack.c.b16 %v1466, %v1460
      %v1515 = vpack.c.b16 %v1467, %v1461
      %v1516 = vpack.c.b16 %v1468, %v1462
      %v1517 = vpack.c.b16 %v1469, %v1463
      %1566 = vmatprep.subr.bf16.mxu0 %v1471
      %1567 = vmatpush1.bf16.msra.mxu0 %v1470
      %1568 = vmatprep.subr.bf16.mxu0 %v1477
      %1569 = vmatpush1.bf16.msra.mxu0 %v1476
      %1570 = vmatprep.subr.bf16.mxu0 %v1483
      %1571 = vmatpush1.bf16.msra.mxu0 %v1482
      %1572 = vmatprep.subr.bf16.mxu0 %v1489
      %1573 = vmatpush1.bf16.msra.mxu0 %v1488
      %1574 = vmatprep.subr.bf16.mxu0 %v1495
      %1575 = vmatpush1.bf16.msra.mxu0 %v1494
      %1576 = vmatprep.subr.bf16.mxu0 %v1501
      %1577 = vmatpush1.bf16.msra.mxu0 %v1500
      %1578 = vmatprep.subr.bf16.mxu0 %v1507
      %1579 = vmatpush1.bf16.msra.mxu0 %v1506
      %1580 = vmatprep.subr.bf16.mxu0 %v1513
      %1581 = vmatpush1.bf16.msra.mxu0 %v1512
      %1582 = vmatprep.subr.bf16.mxu0 0
      %1583 = vmatpush1.bf16.msra.mxu0 0
      %1584 = vmatprep.subr.bf16.mxu0 0
      %1585 = vmatpush1.bf16.msra.mxu0 0
      %1586 = vmatprep.subr.bf16.mxu0 0
      %1587 = vmatpush1.bf16.msra.mxu0 0
      %1588 = vmatprep.subr.bf16.mxu0 0
      %1589 = vmatpush1.bf16.msra.mxu0 0
      %1590 = vmatprep.subr.bf16.mxu0 0
      %1591 = vmatpush1.bf16.msra.mxu0 0
      %1592 = vmatprep.subr.bf16.mxu0 0
      %1593 = vmatpush1.bf16.msra.mxu0 0
      %1594 = vmatprep.subr.bf16.mxu0 0
      %1595 = vmatpush1.bf16.msra.mxu0 0
      %1596 = vmatprep.subr.bf16.mxu0 0
      %1597 = vmatpush1.bf16.msra.mxu0 0
      %1598 = vmatprep.mubr.bf16.mxu0 0
      %1599 = vmatmul.mubr.bf16.gmra.mrb[0].mxu0 %v1245
      %v1600 = vpop.f32.mrb[0].mxu0
      %v1601 = vadd.f32 %v1299, %v1600
      %v1602 = vpop.f32.mrb[0].mxu0
      %v1603 = vadd.f32 %v1303, %v1602
      %v1604 = vpop.f32.mrb[0].mxu0
      %v1605 = vpop.f32.mrb[0].mxu0
      %1606 = vdwg.mxu0
      %1607 = vmatprep.subr.bf16.mxu0 %v1473
      %1608 = vmatpush1.bf16.msra.mxu0 %v1472
      %1609 = vmatprep.subr.bf16.mxu0 %v1479
      %1610 = vmatpush1.bf16.msra.mxu0 %v1478
      %1611 = vmatprep.subr.bf16.mxu0 %v1485
      %1612 = vmatpush1.bf16.msra.mxu0 %v1484
      %1613 = vmatprep.subr.bf16.mxu0 %v1491
      %1614 = vmatpush1.bf16.msra.mxu0 %v1490
      %1615 = vmatprep.subr.bf16.mxu0 %v1497
      %1616 = vmatpush1.bf16.msra.mxu0 %v1496
      %1617 = vmatprep.subr.bf16.mxu0 %v1503
      %1618 = vmatpush1.bf16.msra.mxu0 %v1502
      %1619 = vmatprep.subr.bf16.mxu0 %v1509
      %1620 = vmatpush1.bf16.msra.mxu0 %v1508
      %1621 = vmatprep.subr.bf16.mxu0 %v1515
      %1622 = vmatpush1.bf16.msra.mxu0 %v1514
      %1623 = vmatprep.subr.bf16.mxu0 0
      %1624 = vmatpush1.bf16.msra.mxu0 0
      %1625 = vmatprep.subr.bf16.mxu0 0
      %1626 = vmatpush1.bf16.msra.mxu0 0
      %1627 = vmatprep.subr.bf16.mxu0 0
      %1628 = vmatpush1.bf16.msra.mxu0 0
      %1629 = vmatprep.subr.bf16.mxu0 0
      %1630 = vmatpush1.bf16.msra.mxu0 0
      %1631 = vmatprep.subr.bf16.mxu0 0
      %1632 = vmatpush1.bf16.msra.mxu0 0
      %1633 = vmatprep.subr.bf16.mxu0 0
      %1634 = vmatpush1.bf16.msra.mxu0 0
      %1635 = vmatprep.subr.bf16.mxu0 0
      %1636 = vmatpush1.bf16.msra.mxu0 0
      %1637 = vmatprep.subr.bf16.mxu0 0
      %1638 = vmatpush1.bf16.msra.mxu0 0
      %1639 = vmatprep.mubr.bf16.mxu0 0
      %1640 = vmatmul.mubr.bf16.gmra.mrb[0].mxu0 %v1245
      %v1641 = vpop.f32.mrb[0].mxu0
      %v1642 = vadd.f32 %v1307, %v1641
      %v1643 = vpop.f32.mrb[0].mxu0
      %v1644 = vadd.f32 %v1311, %v1643
      %v1645 = vpop.f32.mrb[0].mxu0
      %v1646 = vpop.f32.mrb[0].mxu0
      %1647 = vdwg.mxu0
      %1648 = vmatprep.subr.bf16.mxu0 %v1475
      %1649 = vmatpush1.bf16.msra.mxu0 %v1474
      %1650 = vmatprep.subr.bf16.mxu0 %v1481
      %1651 = vmatpush1.bf16.msra.mxu0 %v1480
      %1652 = vmatprep.subr.bf16.mxu0 %v1487
      %1653 = vmatpush1.bf16.msra.mxu0 %v1486
      %1654 = vmatprep.subr.bf16.mxu0 %v1493
      %1655 = vmatpush1.bf16.msra.mxu0 %v1492
      %1656 = vmatprep.subr.bf16.mxu0 %v1499
      %1657 = vmatpush1.bf16.msra.mxu0 %v1498
      %1658 = vmatprep.subr.bf16.mxu0 %v1505
      %1659 = vmatpush1.bf16.msra.mxu0 %v1504
      %1660 = vmatprep.subr.bf16.mxu0 %v1511
      %1661 = vmatpush1.bf16.msra.mxu0 %v1510
      %1662 = vmatprep.subr.bf16.mxu0 %v1517
      %1663 = vmatpush1.bf16.msra.mxu0 %v1516
      %1664 = vmatprep.subr.bf16.mxu0 0
      %1665 = vmatpush1.bf16.msra.mxu0 0
      %1666 = vmatprep.subr.bf16.mxu0 0
      %1667 = vmatpush1.bf16.msra.mxu0 0
      %1668 = vmatprep.subr.bf16.mxu0 0
      %1669 = vmatpush1.bf16.msra.mxu0 0
      %1670 = vmatprep.subr.bf16.mxu0 0
      %1671 = vmatpush1.bf16.msra.mxu0 0
      %1672 = vmatprep.subr.bf16.mxu0 0
      %1673 = vmatpush1.bf16.msra.mxu0 0
      %1674 = vmatprep.subr.bf16.mxu0 0
      %1675 = vmatpush1.bf16.msra.mxu0 0
      %1676 = vmatprep.subr.bf16.mxu0 0
      %1677 = vmatpush1.bf16.msra.mxu0 0
      %1678 = vmatprep.subr.bf16.mxu0 0
      %1679 = vmatpush1.bf16.msra.mxu0 0
      %1680 = vmatprep.mubr.bf16.mxu0 0
      %1681 = vmatmul.mubr.bf16.gmra.mrb[0].mxu0 %v1245
      %v1682 = vpop.f32.mrb[0].mxu0
      %v1683 = vadd.f32 %v1315, %v1682
      %v1684 = vpop.f32.mrb[0].mxu0
      %v1685 = vadd.f32 %v1319, %v1684
      %v1686 = vpop.f32.mrb[0].mxu0
      %v1687 = vpop.f32.mrb[0].mxu0
      %1688 = vdwg.mxu0
      %1689 = vst [vmem:[%s7] sm:$0xff] %v1601
      %1690 = vst [vmem:[%s7 + $0x8] sm:$0xff] %v1603
      %1691 = vst [vmem:[%s7 + $0x10] sm:$0xff] %v1642
      %1692 = vst [vmem:[%s7 + $0x18] sm:$0xff] %v1644
      %1693 = vst [vmem:[%s7 + $0x20] sm:$0xff] %v1683
      %1694 = vst [vmem:[%s7 + $0x28] sm:$0xff] %v1685
    $region45: #{mlp_forward.1} parent=1 // pred_fallthru
      _
    // Predicated region
    $region46: #{mlp_forward.1} parent=1 // pred_check
      _
    $region47: #{mlp_forward.1} parent=1 // pred_check_branch
      %1696 = sbr.rel (0) target = $region49
    $region48: #{mlp_forward.1} parent=1 // pred_region
      _
    $region49: #{mlp_forward.1} parent=1 // pred_fallthru
      _
    // Predicated region
    $region50: #{mlp_forward.1} parent=1 // pred_check
      _
    $region51: #{mlp_forward.1} parent=1 // pred_check_branch
      %1698 = sbr.rel (0) target = $region53
    $region52: #{mlp_forward.1} parent=1 // pred_region
      _
    $region53: #{mlp_forward.1} parent=1 // pred_fallthru
      _
    %1699 = vsyncpa [#allocation4], 1
    %1700 = vsyncpa [#allocation6], 1

</llo_original>
